<compile_context>
chip_gen: v7x
topology: tpu7x:2x2x1
jax: 0.10.0
libtpu: 0.0.40
codegen_flags: <defaults>
</compile_context>

<pallas_src>
import math
import functools

import jax
import jax.numpy as jnp
from jax.experimental import pallas as pl
from jax.experimental.pallas import tpu as pltpu


# ----------------------------- problem hyper-params -----------------------------
B, H, S, DH = 2, 4, 128, 64     # batch, heads, seq, head-dim (scale=64 -> d_k=64)
SCALE = 64                      # module default: scores divided by sqrt(64)


# --------------------------------- the kernel ---------------------------------
def _attention_kernel(q_ref, k_ref, out_ref, *, inv_scale):
    # q_ref/k_ref: (BLK, S, DH) bf16 ; out_ref: (BLK, S, S) f32.  No reshapes in-kernel.
    q = q_ref[...]
    k = k_ref[...]

    # Batched MXU contraction, bf16 operands, f32 accumulation: (BLK,S,DH)x(BLK,S,DH)->(BLK,S,S).
    # Both operands contract on their minor dim -> no explicit k transpose is emitted.
    scores = jnp.einsum("bqd,bkd->bqk", q, k,
                        preferred_element_type=jnp.float32)
    scores = scores * inv_scale                      # f32 VPU scale (exact for scale=64)

    # TODO(synk): attn_mask (masked_fill_ with -inf) not implemented; the module is only
    # exercised with attn_mask=None.

    # Numerically-stable softmax.
    scores = scores - jnp.max(scores, axis=-1, keepdims=True)
    e = jnp.exp(scores)
    denom = jnp.sum(e, axis=-1, keepdims=True)
    p = e * pl.reciprocal(denom, approx=False)       # exact: rows sum to 1

    # TODO(synk): attention dropout is identity here (eval semantics).
    out_ref[...] = p.astype(out_ref.dtype)


# --------------------------------- the wrapper ---------------------------------
def attention_forward(q, k, v=None, attn_mask=None, scale=SCALE):
    """q, k: (B, H, S, DH) float32.  Returns (B, H, S, S) f32 attention weights.

    `v` is accepted for interface parity with the PyTorch module but is unused by its
    forward (it returns the softmaxed scores), so it is never DMA'd."""
    assert attn_mask is None  # TODO(synk): boolean attn_mask path not supported
    b, h, s, d = q.shape
    bh = b * h

    # Leading-dim collapse + bf16 cast happen in XLA (fused, cheap); kernel sees 3-D refs.
    q2 = q.reshape(bh, s, d).astype(jnp.bfloat16)
    k2 = k.reshape(bh, s, d).astype(jnp.bfloat16)

    n_blocks = 2                       # 2 TCs on v7x; pipelined DMA overlap on v5e/v6e
    blk = bh // n_blocks
    assert blk * n_blocks == bh

    cost = pl.CostEstimate(
        flops=2 * bh * s * s * d,                       # the QK^T matmul
        transcendentals=bh * s * s,                     # exp
        bytes_accessed=q2.size * 2 + k2.size * 2 + bh * s * s * 4,
    )

    kernel = functools.partial(_attention_kernel, inv_scale=1.0 / math.sqrt(scale))
    out = pl.pallas_call(
        kernel,
        out_shape=jax.ShapeDtypeStruct((bh, s, s), jnp.float32),
        grid_spec=pl.GridSpec(
            grid=(n_blocks,),
            in_specs=[
                pl.BlockSpec((blk, s, d), lambda i: (i, 0, 0)),
                pl.BlockSpec((blk, s, d), lambda i: (i, 0, 0)),
            ],
            out_specs=pl.BlockSpec((blk, s, s), lambda i: (i, 0, 0)),
        ),
        compiler_params=pltpu.CompilerParams(
            dimension_semantics=("parallel",)),
        cost_estimate=cost,
    )(q2, k2)

    return out.reshape(b, h, s, s)


# ------------------------------ pure-JAX references ------------------------------
def reference_forward_f32(q, k, scale=SCALE):
    s = jnp.einsum("bhqd,bhkd->bhqk", q, k) / math.sqrt(scale)
    return jax.nn.softmax(s, axis=-1)


def reference_forward_bf16_inputs(q, k, scale=SCALE):
    # Same operand quantization as the kernel (bf16 operands, f32 math).
    qb = q.astype(jnp.bfloat16).astype(jnp.float32)
    kb = k.astype(jnp.bfloat16).astype(jnp.float32)
    s = jnp.einsum("bhqd,bhkd->bhqk", qb, kb) / math.sqrt(scale)
    return jax.nn.softmax(s, axis=-1)


# ------------------------------------ main ------------------------------------
if __name__ == "__main__":
    key = jax.random.PRNGKey(0)
    kq, kk, kv = jax.random.split(key, 3)

    q = jax.random.normal(kq, (B, H, S, DH), jnp.float32)
    k = jax.random.normal(kk, (B, H, S, DH), jnp.float32)
    v = jax.random.normal(kv, (B, H, S, DH), jnp.float32)   # unused by the module

    out = attention_forward(q, k, v)
    out = jax.block_until_ready(out)
    assert out.shape == (B, H, S, S)

    # Kernel vs reference with the same bf16 operand quantization: tight tolerance.
    ref_bf16 = reference_forward_bf16_inputs(q, k)
    assert jnp.allclose(out, ref_bf16, rtol=2e-3, atol=2e-3), "mismatch vs bf16-operand reference"

    # Kernel vs strict-f32 reference: bf16 operands cost ~1e-3 relative; stay within 1e-2.
    ref_f32 = reference_forward_f32(q, k)
    assert jnp.allclose(out, ref_f32, rtol=1e-2, atol=1e-2), "mismatch vs f32 reference"

    # Exact reciprocal -> rows sum to 1 to f32 rounding.
    assert jnp.allclose(jnp.sum(out, axis=-1), 1.0, atol=1e-3), "softmax rows must sum to 1"

    print("KERNEL_OK")
</pallas_src>

<mosaic_0001>
module attributes {stable_mosaic.version = 11 : i64} {
  func.func @_attention_kernel(%arg0: i32, %arg1: memref<4x128x64xbf16, #tpu.memory_space<vmem>>, %arg2: memref<4x128x64xbf16, #tpu.memory_space<vmem>>, %arg3: memref<4x128x128xf32, #tpu.memory_space<vmem>>) attributes {dimension_semantics = [#tpu.dimension_semantics<parallel>], iteration_bounds = array<i64: 2>, scalar_prefetch = 0 : i64, scratch_operands = 0 : i64, tpu.core_type = #tpu.core_type<tc>, window_params = [{transform_indices = @transform_0, window_bounds = array<i64: 4, 128, 64>}, {transform_indices = @transform_1, window_bounds = array<i64: 4, 128, 64>}, {transform_indices = @transform_2, window_bounds = array<i64: 4, 128, 128>}]} {
    %c0 = arith.constant 0 : index
    %c0_0 = arith.constant 0 : index
    %c0_1 = arith.constant 0 : index
    %0 = vector.load %arg1[%c0, %c0_0, %c0_1] : memref<4x128x64xbf16, #tpu.memory_space<vmem>>, vector<4x128x64xbf16>
    %c0_2 = arith.constant 0 : index
    %c0_3 = arith.constant 0 : index
    %c0_4 = arith.constant 0 : index
    %1 = vector.load %arg2[%c0_2, %c0_3, %c0_4] : memref<4x128x64xbf16, #tpu.memory_space<vmem>>, vector<4x128x64xbf16>
    "tpu.trace_start"() <{level = 10 : i32, message = "bqd,bkd->bqk"}> : () -> ()
    %cst = arith.constant dense<0.000000e+00> : vector<4x128x128xf32>
    %2 = tpu.matmul %0, %1, %cst {dimension_numbers = #tpu.dot_dimension_numbers<[2], [2], [1], [1], [0, 0, 0, 1, 1, 1], [0], [0]>} : vector<4x128x64xbf16>, vector<4x128x64xbf16>, vector<4x128x128xf32> -> vector<4x128x128xf32>
    "tpu.trace_stop"() : () -> ()
    %cst_5 = arith.constant 1.250000e-01 : f32
    %3 = vector.broadcast %cst_5 : f32 to vector<4x128x128xf32>
    %4 = arith.mulf %2, %3 : vector<4x128x128xf32>
    %cst_6 = arith.constant dense<0xFF800000> : vector<4x128xf32>
    %5 = vector.multi_reduction <maximumf>, %4, %cst_6 [2] : vector<4x128x128xf32> to vector<4x128xf32>
    %6 = vector.shape_cast %5 : vector<4x128xf32> to vector<4x128x1xf32>
    %7 = vector.broadcast %6 : vector<4x128x1xf32> to vector<4x128x128xf32>
    %8 = arith.subf %4, %7 : vector<4x128x128xf32>
    %9 = math.exp %8 : vector<4x128x128xf32>
    %cst_7 = arith.constant dense<0.000000e+00> : vector<4x128xf32>
    %10 = vector.multi_reduction <add>, %9, %cst_7 [2] : vector<4x128x128xf32> to vector<4x128xf32>
    %11 = vector.shape_cast %10 : vector<4x128xf32> to vector<4x128x1xf32>
    %12 = tpu.reciprocal %11 : vector<4x128x1xf32> -> vector<4x128x1xf32>
    %13 = vector.broadcast %12 : vector<4x128x1xf32> to vector<4x128x128xf32>
    %14 = arith.mulf %9, %13 : vector<4x128x128xf32>
    %c0_8 = arith.constant 0 : index
    %c0_9 = arith.constant 0 : index
    %c0_10 = arith.constant 0 : index
    %15 = vector.load %arg3[%c0_8, %c0_9, %c0_10] : memref<4x128x128xf32, #tpu.memory_space<vmem>>, vector<4x128x128xf32>
    tpu.vector_store %arg3[%c0_8, %c0_9, %c0_10], %14 {strides = array<i32>} : memref<4x128x128xf32, #tpu.memory_space<vmem>>, vector<4x128x128xf32>,
    return
  }
  func.func @transform_0(%arg0: i32) -> (i32, i32, i32) {
    %c0_i32 = arith.constant 0 : i32
    %c0_i32_0 = arith.constant 0 : i32
    %c0_i32_1 = arith.constant 0 : i32
    return %arg0, %c0_i32, %c0_i32_0 : i32, i32, i32
  }
  func.func @transform_1(%arg0: i32) -> (i32, i32, i32) {
    %c0_i32 = arith.constant 0 : i32
    %c0_i32_0 = arith.constant 0 : i32
    %c0_i32_1 = arith.constant 0 : i32
    return %arg0, %c0_i32, %c0_i32_0 : i32, i32, i32
  }
  func.func @transform_2(%arg0: i32) -> (i32, i32, i32) {
    %c0_i32 = arith.constant 0 : i32
    %c0_i32_0 = arith.constant 0 : i32
    %c0_i32_1 = arith.constant 0 : i32
    return %arg0, %c0_i32, %c0_i32_0 : i32, i32, i32
  }
}

</mosaic_0001>

<llo_original>
// kernel: tpu_custom_call.1
$region0: #{tpu_custom_call.1}
  #allocation0 [shape = 'u32[]', space=smem, size = 0x4, offset = 0x4, fixed_abs, tag = 'smem constant byte address 0x4 - core index']
  #allocation1 [shape = 'u32[144,128]{1,0:T(1,128)}', space=vmem, size = 0x12000, scoped, tag = 'internal scratch']
  %s0 = inlined_call_operand.vmem [shape: bf16[8,128,64], index: 0, kind: input, shape index: {}]
  %s1 = inlined_call_operand.vmem [shape: bf16[8,128,64], index: 1, kind: input, shape index: {}]
  %s2 = inlined_call_operand.hbm [shape: f32[8,128,128], index: 2, kind: output, shape index: {}]
  %s3 = sld [smem:[#allocation0]]
  $region41: #{tpu_custom_call.1} parent=0
    _
  %s5 = ssub.s32 1, %s3
  %s6 = scalar_select 0, %s5, %s3
  $region1: #{tpu_custom_call.1} parent=0
    #allocation2 [shape = 'u8[524288]{0}', space=vmem, size = 0x80000, scoped, tag = 'output window, operand 0']
    #allocation3 [shape = 's32[2]{0}', space=sflag, size = 0x8, scoped, tag = 'scoped memory for tpu_custom_call.1']
    %7 = vsyncpa [#allocation3], 0
    %s8 = scalar_lea.sflag [#allocation3], 1
    %9 = vsyncpa %s8, 0
    loop: start=0, step=1, limit=4
    $region2: #{tpu_custom_call.1} parent=1 // loop_pre_header
      _
    $region3: #{tpu_custom_call.1} parent=1 // loop_header
      %s11 = sphi 0, %s15
      %p12 = scmp.ge.s32.totalorder %s11, 4
      %s21 = sphi 0, %s23
      %s24 = sphi 0, %s21
      %s25 = sphi 0, %s24
      %s41 = sphi 0, %s25
      %s47 = sphi 0, %s49
      %s50 = sphi 0, %s47
      %s51 = sphi 0, %s50
      %s67 = sphi 0, %s51
      %s73 = sphi 0, %s75
      %s76 = sphi 0, %s73
      %s77 = sphi 0, %s76
      %s93 = sphi 0, %s77
    $region4: #{tpu_custom_call.1} parent=1 // loop_header_branch
      %14 = sbr.rel (%p12) target = $region8
    $region5: #{tpu_custom_call.1} parent=1 // loop_body
      %s16 = ssub.s32 %s11, 1
      %s17 = ssub.s32 %s11, 2
      %s18 = sadd.s32 %s11, 1
      %s19 = ssub.s32 %s11, %s18
      %p20 = scmp.eq.s32.totalorder %s19, 0
      %s22 = sadd.s32 %s21, 1
      %s23 = scalar_select %p20, %s21, %s22
      %p26 = pneg %p20
      %p27 = scmp.eq.s32.totalorder %s11, 1
      %p28 = por %p26, %p27
      %p29 = scmp.ne.s32.totalorder %s21, %s24
      %p30 = scmp.eq.s32.totalorder %s11, 0
      %p31 = por %p29, %p30
      %p32 = scmp.ne.s32.totalorder %s21, %s24
      %p33 = scmp.eq.s32.totalorder %s16, 1
      %p34 = por %p32, %p33
      %p35 = scmp.ne.s32.totalorder %s24, %s25
      %p36 = scmp.eq.s32.totalorder %s16, 0
      %p37 = por %p35, %p36
      %p38 = scmp.ne.s32.totalorder %s24, %s25
      %p39 = scmp.eq.s32.totalorder %s17, 1
      %p40 = por %p38, %p39
      %p42 = scmp.ne.s32.totalorder %s25, %s41
      %p43 = scmp.eq.s32.totalorder %s17, 0
      %p44 = por %p42, %p43
      %s45 = ssub.s32 %s11, %s18
      %p46 = scmp.eq.s32.totalorder %s45, 0
      %s48 = sadd.s32 %s47, 1
      %s49 = scalar_select %p46, %s47, %s48
      %p52 = pneg %p46
      %p53 = scmp.eq.s32.totalorder %s11, 1
      %p54 = por %p52, %p53
      %p55 = scmp.ne.s32.totalorder %s47, %s50
      %p56 = scmp.eq.s32.totalorder %s11, 0
      %p57 = por %p55, %p56
      %p58 = scmp.ne.s32.totalorder %s47, %s50
      %p59 = scmp.eq.s32.totalorder %s16, 1
      %p60 = por %p58, %p59
      %p61 = scmp.ne.s32.totalorder %s50, %s51
      %p62 = scmp.eq.s32.totalorder %s16, 0
      %p63 = por %p61, %p62
      %p64 = scmp.ne.s32.totalorder %s50, %s51
      %p65 = scmp.eq.s32.totalorder %s17, 1
      %p66 = por %p64, %p65
      %p68 = scmp.ne.s32.totalorder %s51, %s67
      %p69 = scmp.eq.s32.totalorder %s17, 0
      %p70 = por %p68, %p69
      %s71 = ssub.s32 %s11, %s18
      %p72 = scmp.eq.s32.totalorder %s71, 0
      %s74 = sadd.s32 %s73, 1
      %s75 = scalar_select %p72, %s73, %s74
      %p78 = pneg %p72
      %p79 = scmp.eq.s32.totalorder %s11, 1
      %p80 = por %p78, %p79
      %p81 = scmp.ne.s32.totalorder %s73, %s76
      %p82 = scmp.eq.s32.totalorder %s11, 0
      %p83 = por %p81, %p82
      %p84 = scmp.ne.s32.totalorder %s73, %s76
      %p85 = scmp.eq.s32.totalorder %s16, 1
      %p86 = por %p84, %p85
      %p87 = scmp.ne.s32.totalorder %s76, %s77
      %p88 = scmp.eq.s32.totalorder %s16, 0
      %p89 = por %p87, %p88
      %p90 = scmp.ne.s32.totalorder %s76, %s77
      %p91 = scmp.eq.s32.totalorder %s17, 1
      %p92 = por %p90, %p91
      %p94 = scmp.ne.s32.totalorder %s77, %s93
      %p95 = scmp.eq.s32.totalorder %s17, 0
      %p96 = por %p94, %p95
      %p97 = scmp.le.s32.totalorder 1, %s11
      %p98 = scmp.lt.s32.totalorder %s11, 3
      %p99 = pnand %p97, %p98
      %p100 = pneg %p99
      // Predicated region
      $region9: #{tpu_custom_call.1} parent=5 // pred_check
        _
      $region10: #{tpu_custom_call.1} parent=5 // pred_check_branch
        %102 = sbr.rel (%p99) target = $region12
      $region11: #{tpu_custom_call.1} parent=5 // pred_region
        %s103 = ssub.s32 %s11, 1
      $region12: #{tpu_custom_call.1} parent=5 // pred_fallthru
        _
      %p104 = scmp.lt.s32.totalorder %s11, 2
      // Predicated region
      $region13: #{tpu_custom_call.1} parent=5 // pred_check
        %p105 = pneg %p104
      $region14: #{tpu_custom_call.1} parent=5 // pred_check_branch
        %107 = sbr.rel (%p105) target = $region16
      $region15: #{tpu_custom_call.1} parent=5 // pred_region
        // Predicated region
        $region17: #{tpu_custom_call.1} parent=15 // pred_check
          %p108 = pneg %p31
        $region18: #{tpu_custom_call.1} parent=15 // pred_check_branch
          %110 = sbr.rel (%p108) target = $region20
        $region19: #{tpu_custom_call.1} parent=15 // pred_region
          %s111 = smul.u32 4, %s11
          %p112 = scmp.lt.s32.totalorder %s111, 7
          %s113 = scalar_select %p112, %s111, 7
          %s114 = smul.addr %s113, 16
          %s115 = smul.addr %s114, 4
          %s116 = scalar_lea.vmem %s0, %s115
          %s117 = smul.u32 4, %s11
        $region20: #{tpu_custom_call.1} parent=15 // pred_fallthru
          _
        // Predicated region
        $region21: #{tpu_custom_call.1} parent=15 // pred_check
          %p118 = pneg %p57
        $region22: #{tpu_custom_call.1} parent=15 // pred_check_branch
          %120 = sbr.rel (%p118) target = $region24
        $region23: #{tpu_custom_call.1} parent=15 // pred_region
          %s121 = smul.u32 4, %s11
          %p122 = scmp.lt.s32.totalorder %s121, 7
          %s123 = scalar_select %p122, %s121, 7
          %s124 = smul.addr %s123, 16
          %s125 = smul.addr %s124, 4
          %s126 = scalar_lea.vmem %s1, %s125
          %s127 = smul.u32 4, %s11
        $region24: #{tpu_custom_call.1} parent=15 // pred_fallthru
          _
      $region16: #{tpu_custom_call.1} parent=5 // pred_fallthru
        _
      %p128 = scmp.le.s32.totalorder 1, %s11
      %p129 = scmp.lt.s32.totalorder %s11, 3
      %p130 = pnand %p128, %p129
      %p131 = pneg %p130
      // Predicated region
      $region25: #{tpu_custom_call.1} parent=5 // pred_check
        _
      $region26: #{tpu_custom_call.1} parent=5 // pred_check_branch
        %133 = sbr.rel (%p130) target = $region28
      $region27: #{tpu_custom_call.1} parent=5 // pred_region
        %s134 = ssub.s32 %s11, 1
        %s135 = smul.u32 4, %s16
        %p136 = scmp.lt.s32.totalorder %s135, 7
        %s137 = scalar_select %p136, %s135, 7
        %s138 = smul.addr %s137, 16
        %s139 = smul.addr %s138, 4
        %s140 = scalar_lea.vmem %s0, %s139
        %p141 = pneg %p37
        %p142 = pneg %p34
        %s143 = smul.u32 4, %s16
        %p144 = scmp.lt.s32.totalorder %s143, 7
        %s145 = scalar_select %p144, %s143, 7
        %s146 = smul.addr %s145, 16
        %s147 = smul.addr %s146, 4
        %s148 = scalar_lea.vmem %s1, %s147
        %p149 = pneg %p63
        %p150 = pneg %p60
        %p151 = pneg %p89
        %p152 = pneg %p86
        %s153 = sand.u32 %s76, 1
        %s154 = scalar_lea.sflag [#allocation3], %s153
        %s155 = sand.u32 %s76, 1
        %s156 = smul.addr %s155, 512
        %s157 = scalar_lea.vmem [#allocation2], %s156
        %s158 = smul.u32 4, %s16
        %p159 = scmp.lt.s32.totalorder %s158, 7
        %s160 = scalar_select %p159, %s158, 7
        %s161 = smul.addr %s160, 16
        %s162 = smul.addr %s161, 4
        %s163 = scalar_lea.vmem %s0, %s162
        %s164 = smul.u32 4, %s16
        %s165 = smul.u32 4, %s16
        %p166 = scmp.lt.s32.totalorder %s165, 7
        %s167 = scalar_select %p166, %s165, 7
        %s168 = smul.addr %s167, 16
        %s169 = smul.addr %s168, 4
        %s170 = scalar_lea.vmem %s1, %s169
        %s171 = smul.u32 4, %s16
        %s172 = smul.u32 4, %s16
        %v174 = vld [vmem:[%s163] sm:$0xf]
        %v175 = vld [vmem:[%s163 + $0x4] sm:$0xf]
        %v176 = vld [vmem:[%s163 + $0x8] sm:$0xf]
        %v177 = vld [vmem:[%s163 + $0xc] sm:$0xf]
        %v178 = vld [vmem:[%s163 + $0x10] sm:$0xf]
        %v179 = vld [vmem:[%s163 + $0x14] sm:$0xf]
        %v180 = vld [vmem:[%s163 + $0x18] sm:$0xf]
        %v181 = vld [vmem:[%s163 + $0x1c] sm:$0xf]
        %v182 = vld [vmem:[%s163 + $0x20] sm:$0xf]
        %v183 = vld [vmem:[%s163 + $0x24] sm:$0xf]
        %v184 = vld [vmem:[%s163 + $0x28] sm:$0xf]
        %v185 = vld [vmem:[%s163 + $0x2c] sm:$0xf]
        %v186 = vld [vmem:[%s163 + $0x30] sm:$0xf]
        %v187 = vld [vmem:[%s163 + $0x34] sm:$0xf]
        %v188 = vld [vmem:[%s163 + $0x38] sm:$0xf]
        %v189 = vld [vmem:[%s163 + $0x3c] sm:$0xf]
        %v190 = vld [vmem:[%s163 + $0x40] sm:$0xf]
        %v191 = vld [vmem:[%s163 + $0x44] sm:$0xf]
        %v192 = vld [vmem:[%s163 + $0x48] sm:$0xf]
        %v193 = vld [vmem:[%s163 + $0x4c] sm:$0xf]
        %v194 = vld [vmem:[%s163 + $0x50] sm:$0xf]
        %v195 = vld [vmem:[%s163 + $0x54] sm:$0xf]
        %v196 = vld [vmem:[%s163 + $0x58] sm:$0xf]
        %v197 = vld [vmem:[%s163 + $0x5c] sm:$0xf]
        %v198 = vld [vmem:[%s163 + $0x60] sm:$0xf]
        %v199 = vld [vmem:[%s163 + $0x64] sm:$0xf]
        %v200 = vld [vmem:[%s163 + $0x68] sm:$0xf]
        %v201 = vld [vmem:[%s163 + $0x6c] sm:$0xf]
        %v202 = vld [vmem:[%s163 + $0x70] sm:$0xf]
        %v203 = vld [vmem:[%s163 + $0x74] sm:$0xf]
        %v204 = vld [vmem:[%s163 + $0x78] sm:$0xf]
        %v205 = vld [vmem:[%s163 + $0x7c] sm:$0xf]
        %v206 = vld [vmem:[%s163 + $0x80] sm:$0xf]
        %v207 = vld [vmem:[%s163 + $0x84] sm:$0xf]
        %v208 = vld [vmem:[%s163 + $0x88] sm:$0xf]
        %v209 = vld [vmem:[%s163 + $0x8c] sm:$0xf]
        %v210 = vld [vmem:[%s163 + $0x90] sm:$0xf]
        %v211 = vld [vmem:[%s163 + $0x94] sm:$0xf]
        %v212 = vld [vmem:[%s163 + $0x98] sm:$0xf]
        %v213 = vld [vmem:[%s163 + $0x9c] sm:$0xf]
        %v214 = vld [vmem:[%s163 + $0xa0] sm:$0xf]
        %v215 = vld [vmem:[%s163 + $0xa4] sm:$0xf]
        %v216 = vld [vmem:[%s163 + $0xa8] sm:$0xf]
        %v217 = vld [vmem:[%s163 + $0xac] sm:$0xf]
        %v218 = vld [vmem:[%s163 + $0xb0] sm:$0xf]
        %v219 = vld [vmem:[%s163 + $0xb4] sm:$0xf]
        %v220 = vld [vmem:[%s163 + $0xb8] sm:$0xf]
        %v221 = vld [vmem:[%s163 + $0xbc] sm:$0xf]
        %v222 = vld [vmem:[%s163 + $0xc0] sm:$0xf]
        %v223 = vld [vmem:[%s163 + $0xc4] sm:$0xf]
        %v224 = vld [vmem:[%s163 + $0xc8] sm:$0xf]
        %v225 = vld [vmem:[%s163 + $0xcc] sm:$0xf]
        %v226 = vld [vmem:[%s163 + $0xd0] sm:$0xf]
        %v227 = vld [vmem:[%s163 + $0xd4] sm:$0xf]
        %v228 = vld [vmem:[%s163 + $0xd8] sm:$0xf]
        %v229 = vld [vmem:[%s163 + $0xdc] sm:$0xf]
        %v230 = vld [vmem:[%s163 + $0xe0] sm:$0xf]
        %v231 = vld [vmem:[%s163 + $0xe4] sm:$0xf]
        %v232 = vld [vmem:[%s163 + $0xe8] sm:$0xf]
        %v233 = vld [vmem:[%s163 + $0xec] sm:$0xf]
        %v234 = vld [vmem:[%s163 + $0xf0] sm:$0xf]
        %v235 = vld [vmem:[%s163 + $0xf4] sm:$0xf]
        %v236 = vld [vmem:[%s163 + $0xf8] sm:$0xf]
        %v237 = vld [vmem:[%s163 + $0xfc] sm:$0xf]
        %v238 = vld [vmem:[%s170] sm:$0xf]
        %v239 = vld [vmem:[%s170 + $0x4] sm:$0xf]
        %v240 = vld [vmem:[%s170 + $0x8] sm:$0xf]
        %v241 = vld [vmem:[%s170 + $0xc] sm:$0xf]
        %v242 = vld [vmem:[%s170 + $0x10] sm:$0xf]
        %v243 = vld [vmem:[%s170 + $0x14] sm:$0xf]
        %v244 = vld [vmem:[%s170 + $0x18] sm:$0xf]
        %v245 = vld [vmem:[%s170 + $0x1c] sm:$0xf]
        %v246 = vld [vmem:[%s170 + $0x20] sm:$0xf]
        %v247 = vld [vmem:[%s170 + $0x24] sm:$0xf]
        %v248 = vld [vmem:[%s170 + $0x28] sm:$0xf]
        %v249 = vld [vmem:[%s170 + $0x2c] sm:$0xf]
        %v250 = vld [vmem:[%s170 + $0x30] sm:$0xf]
        %v251 = vld [vmem:[%s170 + $0x34] sm:$0xf]
        %v252 = vld [vmem:[%s170 + $0x38] sm:$0xf]
        %v253 = vld [vmem:[%s170 + $0x3c] sm:$0xf]
        %v254 = vld [vmem:[%s170 + $0x40] sm:$0xf]
        %v255 = vld [vmem:[%s170 + $0x44] sm:$0xf]
        %v256 = vld [vmem:[%s170 + $0x48] sm:$0xf]
        %v257 = vld [vmem:[%s170 + $0x4c] sm:$0xf]
        %v258 = vld [vmem:[%s170 + $0x50] sm:$0xf]
        %v259 = vld [vmem:[%s170 + $0x54] sm:$0xf]
        %v260 = vld [vmem:[%s170 + $0x58] sm:$0xf]
        %v261 = vld [vmem:[%s170 + $0x5c] sm:$0xf]
        %v262 = vld [vmem:[%s170 + $0x60] sm:$0xf]
        %v263 = vld [vmem:[%s170 + $0x64] sm:$0xf]
        %v264 = vld [vmem:[%s170 + $0x68] sm:$0xf]
        %v265 = vld [vmem:[%s170 + $0x6c] sm:$0xf]
        %v266 = vld [vmem:[%s170 + $0x70] sm:$0xf]
        %v267 = vld [vmem:[%s170 + $0x74] sm:$0xf]
        %v268 = vld [vmem:[%s170 + $0x78] sm:$0xf]
        %v269 = vld [vmem:[%s170 + $0x7c] sm:$0xf]
        %v270 = vld [vmem:[%s170 + $0x80] sm:$0xf]
        %v271 = vld [vmem:[%s170 + $0x84] sm:$0xf]
        %v272 = vld [vmem:[%s170 + $0x88] sm:$0xf]
        %v273 = vld [vmem:[%s170 + $0x8c] sm:$0xf]
        %v274 = vld [vmem:[%s170 + $0x90] sm:$0xf]
        %v275 = vld [vmem:[%s170 + $0x94] sm:$0xf]
        %v276 = vld [vmem:[%s170 + $0x98] sm:$0xf]
        %v277 = vld [vmem:[%s170 + $0x9c] sm:$0xf]
        %v278 = vld [vmem:[%s170 + $0xa0] sm:$0xf]
        %v279 = vld [vmem:[%s170 + $0xa4] sm:$0xf]
        %v280 = vld [vmem:[%s170 + $0xa8] sm:$0xf]
        %v281 = vld [vmem:[%s170 + $0xac] sm:$0xf]
        %v282 = vld [vmem:[%s170 + $0xb0] sm:$0xf]
        %v283 = vld [vmem:[%s170 + $0xb4] sm:$0xf]
        %v284 = vld [vmem:[%s170 + $0xb8] sm:$0xf]
        %v285 = vld [vmem:[%s170 + $0xbc] sm:$0xf]
        %v286 = vld [vmem:[%s170 + $0xc0] sm:$0xf]
        %v287 = vld [vmem:[%s170 + $0xc4] sm:$0xf]
        %v288 = vld [vmem:[%s170 + $0xc8] sm:$0xf]
        %v289 = vld [vmem:[%s170 + $0xcc] sm:$0xf]
        %v290 = vld [vmem:[%s170 + $0xd0] sm:$0xf]
        %v291 = vld [vmem:[%s170 + $0xd4] sm:$0xf]
        %v292 = vld [vmem:[%s170 + $0xd8] sm:$0xf]
        %v293 = vld [vmem:[%s170 + $0xdc] sm:$0xf]
        %v294 = vld [vmem:[%s170 + $0xe0] sm:$0xf]
        %v295 = vld [vmem:[%s170 + $0xe4] sm:$0xf]
        %v296 = vld [vmem:[%s170 + $0xe8] sm:$0xf]
        %v297 = vld [vmem:[%s170 + $0xec] sm:$0xf]
        %v298 = vld [vmem:[%s170 + $0xf0] sm:$0xf]
        %v299 = vld [vmem:[%s170 + $0xf4] sm:$0xf]
        %v300 = vld [vmem:[%s170 + $0xf8] sm:$0xf]
        %v301 = vld [vmem:[%s170 + $0xfc] sm:$0xf]
        %v318 = vunpack.c.l.b16 %v174
        %v319 = vunpack.c.l.b16 %v175
        %v320 = vunpack.c.l.b16 %v176
        %v321 = vunpack.c.l.b16 %v177
        %v322 = vunpack.c.l.b16 %v178
        %v323 = vunpack.c.l.b16 %v179
        %v324 = vunpack.c.l.b16 %v180
        %v325 = vunpack.c.l.b16 %v181
        %v326 = vunpack.c.l.b16 %v182
        %v327 = vunpack.c.l.b16 %v183
        %v328 = vunpack.c.l.b16 %v184
        %v329 = vunpack.c.l.b16 %v185
        %v330 = vunpack.c.l.b16 %v186
        %v331 = vunpack.c.l.b16 %v187
        %v332 = vunpack.c.l.b16 %v188
        %v333 = vunpack.c.l.b16 %v189
        %v334 = vpack.c.b16 %v319, %v318
        %v335 = vpack.c.b16 %v321, %v320
        %v336 = vpack.c.b16 %v323, %v322
        %v337 = vpack.c.b16 %v325, %v324
        %v338 = vpack.c.b16 %v327, %v326
        %v339 = vpack.c.b16 %v329, %v328
        %v340 = vpack.c.b16 %v331, %v330
        %v341 = vpack.c.b16 %v333, %v332
        %v358 = vunpack.c.l.b16 %v238
        %v359 = vunpack.c.l.b16 %v239
        %v360 = vunpack.c.l.b16 %v240
        %v361 = vunpack.c.l.b16 %v241
        %v362 = vunpack.c.l.b16 %v242
        %v363 = vunpack.c.l.b16 %v243
        %v364 = vunpack.c.l.b16 %v244
        %v365 = vunpack.c.l.b16 %v245
        %v366 = vunpack.c.l.b16 %v246
        %v367 = vunpack.c.l.b16 %v247
        %v368 = vunpack.c.l.b16 %v248
        %v369 = vunpack.c.l.b16 %v249
        %v370 = vunpack.c.l.b16 %v250
        %v371 = vunpack.c.l.b16 %v251
        %v372 = vunpack.c.l.b16 %v252
        %v373 = vunpack.c.l.b16 %v253
        %v374 = vpack.c.b16 %v359, %v358
        %v375 = vpack.c.b16 %v361, %v360
        %v376 = vpack.c.b16 %v363, %v362
        %v377 = vpack.c.b16 %v365, %v364
        %v378 = vpack.c.b16 %v367, %v366
        %v379 = vpack.c.b16 %v369, %v368
        %v380 = vpack.c.b16 %v371, %v370
        %v381 = vpack.c.b16 %v373, %v372
        %vm382 = vcmask 523264
        %v384 = vsel %vm382, %v334, 0
        %v387 = vsel %vm382, %v335, 0
        %v390 = vsel %vm382, %v336, 0
        %v393 = vsel %vm382, %v337, 0
        %v396 = vsel %vm382, %v338, 0
        %v399 = vsel %vm382, %v339, 0
        %v402 = vsel %vm382, %v340, 0
        %v405 = vsel %vm382, %v341, 0
        %v408 = vsel %vm382, %v374, 0
        %v411 = vsel %vm382, %v375, 0
        %v414 = vsel %vm382, %v376, 0
        %v417 = vsel %vm382, %v377, 0
        %v420 = vsel %vm382, %v378, 0
        %v423 = vsel %vm382, %v379, 0
        %v426 = vsel %vm382, %v380, 0
        %v429 = vsel %vm382, %v381, 0
        %431 = vmatprep.subr.bf16.mxu0 0
        %432 = vmatpush1.bf16.xpose.msra.mxu0 %v408
        %433 = vmatprep.subr.bf16.mxu0 0
        %434 = vmatpush1.bf16.xpose.msra.mxu0 %v411
        %435 = vmatprep.subr.bf16.mxu0 0
        %436 = vmatpush1.bf16.xpose.msra.mxu0 %v414
        %437 = vmatprep.subr.bf16.mxu0 0
        %438 = vmatpush1.bf16.xpose.msra.mxu0 %v417
        %439 = vmatprep.subr.bf16.mxu0 0
        %440 = vmatpush1.bf16.xpose.msra.mxu0 %v420
        %441 = vmatprep.subr.bf16.mxu0 0
        %442 = vmatpush1.bf16.xpose.msra.mxu0 %v423
        %443 = vmatprep.subr.bf16.mxu0 0
        %444 = vmatpush1.bf16.xpose.msra.mxu0 %v426
        %445 = vmatprep.subr.bf16.mxu0 0
        %446 = vmatpush1.bf16.xpose.msra.mxu0 %v429
        %447 = vmatprep.subr.bf16.mxu0 0
        %448 = vmatpush1.bf16.xpose.msra.mxu0 0
        %449 = vmatprep.subr.bf16.mxu0 0
        %450 = vmatpush1.bf16.xpose.msra.mxu0 0
        %451 = vmatprep.subr.bf16.mxu0 0
        %452 = vmatpush1.bf16.xpose.msra.mxu0 0
        %453 = vmatprep.subr.bf16.mxu0 0
        %454 = vmatpush1.bf16.xpose.msra.mxu0 0
        %455 = vmatprep.subr.bf16.mxu0 0
        %456 = vmatpush1.bf16.xpose.msra.mxu0 0
        %457 = vmatprep.subr.bf16.mxu0 0
        %458 = vmatpush1.bf16.xpose.msra.mxu0 0
        %459 = vmatprep.subr.bf16.mxu0 0
        %460 = vmatpush1.bf16.xpose.msra.mxu0 0
        %461 = vmatprep.subr.bf16.mxu0 0
        %462 = vmatpush1.bf16.xpose.msra.mxu0 0
        %463 = vmatprep.mubr.bf16.mxu0 0
        %464 = vmatmul.mubr.bf16.gmra.mrb[0].mxu0 %v384
        %v465 = vpop.f32.mrb[0].mxu0
        %v466 = vadd.f32 0.0, %v465
        %v467 = vpop.f32.mrb[0].mxu0
        %v468 = vpop.f32.mrb[0].mxu0
        %v469 = vadd.f32 0.0, %v468
        %v470 = vpop.f32.mrb[0].mxu0
        %471 = vmatprep.mubr.bf16.mxu0 0
        %472 = vmatmul.mubr.bf16.gmra.mrb[0].mxu0 %v387
        %v473 = vpop.f32.mrb[0].mxu0
        %v474 = vadd.f32 0.0, %v473
        %v475 = vpop.f32.mrb[0].mxu0
        %v476 = vpop.f32.mrb[0].mxu0
        %v477 = vadd.f32 0.0, %v476
        %v478 = vpop.f32.mrb[0].mxu0
        %479 = vmatprep.mubr.bf16.mxu0 0
        %480 = vmatmul.mubr.bf16.gmra.mrb[0].mxu0 %v390
        %v481 = vpop.f32.mrb[0].mxu0
        %v482 = vadd.f32 0.0, %v481
        %v483 = vpop.f32.mrb[0].mxu0
        %v484 = vpop.f32.mrb[0].mxu0
        %v485 = vadd.f32 0.0, %v484
        %v486 = vpop.f32.mrb[0].mxu0
        %487 = vmatprep.mubr.bf16.mxu0 0
        %488 = vmatmul.mubr.bf16.gmra.mrb[0].mxu0 %v393
        %v489 = vpop.f32.mrb[0].mxu0
        %v490 = vadd.f32 0.0, %v489
        %v491 = vpop.f32.mrb[0].mxu0
        %v492 = vpop.f32.mrb[0].mxu0
        %v493 = vadd.f32 0.0, %v492
        %v494 = vpop.f32.mrb[0].mxu0
        %495 = vmatprep.mubr.bf16.mxu0 0
        %496 = vmatmul.mubr.bf16.gmra.mrb[0].mxu0 %v396
        %v497 = vpop.f32.mrb[0].mxu0
        %v498 = vadd.f32 0.0, %v497
        %v499 = vpop.f32.mrb[0].mxu0
        %v500 = vpop.f32.mrb[0].mxu0
        %v501 = vadd.f32 0.0, %v500
        %v502 = vpop.f32.mrb[0].mxu0
        %503 = vmatprep.mubr.bf16.mxu0 0
        %504 = vmatmul.mubr.bf16.gmra.mrb[0].mxu0 %v399
        %v505 = vpop.f32.mrb[0].mxu0
        %v506 = vadd.f32 0.0, %v505
        %v507 = vpop.f32.mrb[0].mxu0
        %v508 = vpop.f32.mrb[0].mxu0
        %v509 = vadd.f32 0.0, %v508
        %v510 = vpop.f32.mrb[0].mxu0
        %511 = vmatprep.mubr.bf16.mxu0 0
        %512 = vmatmul.mubr.bf16.gmra.mrb[0].mxu0 %v402
        %v513 = vpop.f32.mrb[0].mxu0
        %v514 = vadd.f32 0.0, %v513
        %v515 = vpop.f32.mrb[0].mxu0
        %v516 = vpop.f32.mrb[0].mxu0
        %v517 = vadd.f32 0.0, %v516
        %v518 = vpop.f32.mrb[0].mxu0
        %519 = vmatprep.mubr.bf16.mxu0 0
        %520 = vmatmul.mubr.bf16.gmra.mrb[0].mxu0 %v405
        %v521 = vpop.f32.mrb[0].mxu0
        %v522 = vadd.f32 0.0, %v521
        %v523 = vpop.f32.mrb[0].mxu0
        %v524 = vpop.f32.mrb[0].mxu0
        %v525 = vadd.f32 0.0, %v524
        %v526 = vpop.f32.mrb[0].mxu0
        %527 = vdwg.mxu0
        %v544 = vunpack.c.l.b16 %v190
        %v545 = vunpack.c.l.b16 %v191
        %v546 = vunpack.c.l.b16 %v192
        %v547 = vunpack.c.l.b16 %v193
        %v548 = vunpack.c.l.b16 %v194
        %v549 = vunpack.c.l.b16 %v195
        %v550 = vunpack.c.l.b16 %v196
        %v551 = vunpack.c.l.b16 %v197
        %v552 = vunpack.c.l.b16 %v198
        %v553 = vunpack.c.l.b16 %v199
        %v554 = vunpack.c.l.b16 %v200
        %v555 = vunpack.c.l.b16 %v201
        %v556 = vunpack.c.l.b16 %v202
        %v557 = vunpack.c.l.b16 %v203
        %v558 = vunpack.c.l.b16 %v204
        %v559 = vunpack.c.l.b16 %v205
        %v560 = vpack.c.b16 %v545, %v544
        %v561 = vpack.c.b16 %v547, %v546
        %v562 = vpack.c.b16 %v549, %v548
        %v563 = vpack.c.b16 %v551, %v550
        %v564 = vpack.c.b16 %v553, %v552
        %v565 = vpack.c.b16 %v555, %v554
        %v566 = vpack.c.b16 %v557, %v556
        %v567 = vpack.c.b16 %v559, %v558
        %v584 = vunpack.c.l.b16 %v254
        %v585 = vunpack.c.l.b16 %v255
        %v586 = vunpack.c.l.b16 %v256
        %v587 = vunpack.c.l.b16 %v257
        %v588 = vunpack.c.l.b16 %v258
        %v589 = vunpack.c.l.b16 %v259
        %v590 = vunpack.c.l.b16 %v260
        %v591 = vunpack.c.l.b16 %v261
        %v592 = vunpack.c.l.b16 %v262
        %v593 = vunpack.c.l.b16 %v263
        %v594 = vunpack.c.l.b16 %v264
        %v595 = vunpack.c.l.b16 %v265
        %v596 = vunpack.c.l.b16 %v266
        %v597 = vunpack.c.l.b16 %v267
        %v598 = vunpack.c.l.b16 %v268
        %v599 = vunpack.c.l.b16 %v269
        %v600 = vpack.c.b16 %v585, %v584
        %v601 = vpack.c.b16 %v587, %v586
        %v602 = vpack.c.b16 %v589, %v588
        %v603 = vpack.c.b16 %v591, %v590
        %v604 = vpack.c.b16 %v593, %v592
        %v605 = vpack.c.b16 %v595, %v594
        %v606 = vpack.c.b16 %v597, %v596
        %v607 = vpack.c.b16 %v599, %v598
        %v609 = vsel %vm382, %v560, 0
        %v612 = vsel %vm382, %v561, 0
        %v615 = vsel %vm382, %v562, 0
        %v618 = vsel %vm382, %v563, 0
        %v621 = vsel %vm382, %v564, 0
        %v624 = vsel %vm382, %v565, 0
        %v627 = vsel %vm382, %v566, 0
        %v630 = vsel %vm382, %v567, 0
        %v633 = vsel %vm382, %v600, 0
        %v636 = vsel %vm382, %v601, 0
        %v639 = vsel %vm382, %v602, 0
        %v642 = vsel %vm382, %v603, 0
        %v645 = vsel %vm382, %v604, 0
        %v648 = vsel %vm382, %v605, 0
        %v651 = vsel %vm382, %v606, 0
        %v654 = vsel %vm382, %v607, 0
        %656 = vmatprep.subr.bf16.mxu0 0
        %657 = vmatpush1.bf16.xpose.msra.mxu0 %v633
        %658 = vmatprep.subr.bf16.mxu0 0
        %659 = vmatpush1.bf16.xpose.msra.mxu0 %v636
        %660 = vmatprep.subr.bf16.mxu0 0
        %661 = vmatpush1.bf16.xpose.msra.mxu0 %v639
        %662 = vmatprep.subr.bf16.mxu0 0
        %663 = vmatpush1.bf16.xpose.msra.mxu0 %v642
        %664 = vmatprep.subr.bf16.mxu0 0
        %665 = vmatpush1.bf16.xpose.msra.mxu0 %v645
        %666 = vmatprep.subr.bf16.mxu0 0
        %667 = vmatpush1.bf16.xpose.msra.mxu0 %v648
        %668 = vmatprep.subr.bf16.mxu0 0
        %669 = vmatpush1.bf16.xpose.msra.mxu0 %v651
        %670 = vmatprep.subr.bf16.mxu0 0
        %671 = vmatpush1.bf16.xpose.msra.mxu0 %v654
        %672 = vmatprep.subr.bf16.mxu0 0
        %673 = vmatpush1.bf16.xpose.msra.mxu0 0
        %674 = vmatprep.subr.bf16.mxu0 0
        %675 = vmatpush1.bf16.xpose.msra.mxu0 0
        %676 = vmatprep.subr.bf16.mxu0 0
        %677 = vmatpush1.bf16.xpose.msra.mxu0 0
        %678 = vmatprep.subr.bf16.mxu0 0
        %679 = vmatpush1.bf16.xpose.msra.mxu0 0
        %680 = vmatprep.subr.bf16.mxu0 0
        %681 = vmatpush1.bf16.xpose.msra.mxu0 0
        %682 = vmatprep.subr.bf16.mxu0 0
        %683 = vmatpush1.bf16.xpose.msra.mxu0 0
        %684 = vmatprep.subr.bf16.mxu0 0
        %685 = vmatpush1.bf16.xpose.msra.mxu0 0
        %686 = vmatprep.subr.bf16.mxu0 0
        %687 = vmatpush1.bf16.xpose.msra.mxu0 0
        %688 = vmatprep.mubr.bf16.mxu0 0
        %689 = vmatmul.mubr.bf16.gmra.mrb[0].mxu0 %v609
        %v690 = vpop.f32.mrb[0].mxu0
        %v691 = vadd.f32 0.0, %v690
        %v692 = vpop.f32.mrb[0].mxu0
        %v693 = vpop.f32.mrb[0].mxu0
        %v694 = vadd.f32 0.0, %v693
        %v695 = vpop.f32.mrb[0].mxu0
        %696 = vmatprep.mubr.bf16.mxu0 0
        %697 = vmatmul.mubr.bf16.gmra.mrb[0].mxu0 %v612
        %v698 = vpop.f32.mrb[0].mxu0
        %v699 = vadd.f32 0.0, %v698
        %v700 = vpop.f32.mrb[0].mxu0
        %v701 = vpop.f32.mrb[0].mxu0
        %v702 = vadd.f32 0.0, %v701
        %v703 = vpop.f32.mrb[0].mxu0
        %704 = vmatprep.mubr.bf16.mxu0 0
        %705 = vmatmul.mubr.bf16.gmra.mrb[0].mxu0 %v615
        %v706 = vpop.f32.mrb[0].mxu0
        %v707 = vadd.f32 0.0, %v706
        %v708 = vpop.f32.mrb[0].mxu0
        %v709 = vpop.f32.mrb[0].mxu0
        %v710 = vadd.f32 0.0, %v709
        %v711 = vpop.f32.mrb[0].mxu0
        %712 = vmatprep.mubr.bf16.mxu0 0
        %713 = vmatmul.mubr.bf16.gmra.mrb[0].mxu0 %v618
        %v714 = vpop.f32.mrb[0].mxu0
        %v715 = vadd.f32 0.0, %v714
        %v716 = vpop.f32.mrb[0].mxu0
        %v717 = vpop.f32.mrb[0].mxu0
        %v718 = vadd.f32 0.0, %v717
        %v719 = vpop.f32.mrb[0].mxu0
        %720 = vmatprep.mubr.bf16.mxu0 0
        %721 = vmatmul.mubr.bf16.gmra.mrb[0].mxu0 %v621
        %v722 = vpop.f32.mrb[0].mxu0
        %v723 = vadd.f32 0.0, %v722
        %v724 = vpop.f32.mrb[0].mxu0
        %v725 = vpop.f32.mrb[0].mxu0
        %v726 = vadd.f32 0.0, %v725
        %v727 = vpop.f32.mrb[0].mxu0
        %728 = vmatprep.mubr.bf16.mxu0 0
        %729 = vmatmul.mubr.bf16.gmra.mrb[0].mxu0 %v624
        %v730 = vpop.f32.mrb[0].mxu0
        %v731 = vadd.f32 0.0, %v730
        %v732 = vpop.f32.mrb[0].mxu0
        %v733 = vpop.f32.mrb[0].mxu0
        %v734 = vadd.f32 0.0, %v733
        %v735 = vpop.f32.mrb[0].mxu0
        %736 = vmatprep.mubr.bf16.mxu0 0
        %737 = vmatmul.mubr.bf16.gmra.mrb[0].mxu0 %v627
        %v738 = vpop.f32.mrb[0].mxu0
        %v739 = vadd.f32 0.0, %v738
        %v740 = vpop.f32.mrb[0].mxu0
        %v741 = vpop.f32.mrb[0].mxu0
        %v742 = vadd.f32 0.0, %v741
        %v743 = vpop.f32.mrb[0].mxu0
        %744 = vmatprep.mubr.bf16.mxu0 0
        %745 = vmatmul.mubr.bf16.gmra.mrb[0].mxu0 %v630
        %v746 = vpop.f32.mrb[0].mxu0
        %v747 = vadd.f32 0.0, %v746
        %v748 = vpop.f32.mrb[0].mxu0
        %v749 = vpop.f32.mrb[0].mxu0
        %v750 = vadd.f32 0.0, %v749
        %v751 = vpop.f32.mrb[0].mxu0
        %752 = vdwg.mxu0
        %v769 = vunpack.c.l.b16 %v206
        %v770 = vunpack.c.l.b16 %v207
        %v771 = vunpack.c.l.b16 %v208
        %v772 = vunpack.c.l.b16 %v209
        %v773 = vunpack.c.l.b16 %v210
        %v774 = vunpack.c.l.b16 %v211
        %v775 = vunpack.c.l.b16 %v212
        %v776 = vunpack.c.l.b16 %v213
        %v777 = vunpack.c.l.b16 %v214
        %v778 = vunpack.c.l.b16 %v215
        %v779 = vunpack.c.l.b16 %v216
        %v780 = vunpack.c.l.b16 %v217
        %v781 = vunpack.c.l.b16 %v218
        %v782 = vunpack.c.l.b16 %v219
        %v783 = vunpack.c.l.b16 %v220
        %v784 = vunpack.c.l.b16 %v221
        %v785 = vpack.c.b16 %v770, %v769
        %v786 = vpack.c.b16 %v772, %v771
        %v787 = vpack.c.b16 %v774, %v773
        %v788 = vpack.c.b16 %v776, %v775
        %v789 = vpack.c.b16 %v778, %v777
        %v790 = vpack.c.b16 %v780, %v779
        %v791 = vpack.c.b16 %v782, %v781
        %v792 = vpack.c.b16 %v784, %v783
        %v809 = vunpack.c.l.b16 %v270
        %v810 = vunpack.c.l.b16 %v271
        %v811 = vunpack.c.l.b16 %v272
        %v812 = vunpack.c.l.b16 %v273
        %v813 = vunpack.c.l.b16 %v274
        %v814 = vunpack.c.l.b16 %v275
        %v815 = vunpack.c.l.b16 %v276
        %v816 = vunpack.c.l.b16 %v277
        %v817 = vunpack.c.l.b16 %v278
        %v818 = vunpack.c.l.b16 %v279
        %v819 = vunpack.c.l.b16 %v280
        %v820 = vunpack.c.l.b16 %v281
        %v821 = vunpack.c.l.b16 %v282
        %v822 = vunpack.c.l.b16 %v283
        %v823 = vunpack.c.l.b16 %v284
        %v824 = vunpack.c.l.b16 %v285
        %v825 = vpack.c.b16 %v810, %v809
        %v826 = vpack.c.b16 %v812, %v811
        %v827 = vpack.c.b16 %v814, %v813
        %v828 = vpack.c.b16 %v816, %v815
        %v829 = vpack.c.b16 %v818, %v817
        %v830 = vpack.c.b16 %v820, %v819
        %v831 = vpack.c.b16 %v822, %v821
        %v832 = vpack.c.b16 %v824, %v823
        %v834 = vsel %vm382, %v785, 0
        %v837 = vsel %vm382, %v786, 0
        %v840 = vsel %vm382, %v787, 0
        %v843 = vsel %vm382, %v788, 0
        %v846 = vsel %vm382, %v789, 0
        %v849 = vsel %vm382, %v790, 0
        %v852 = vsel %vm382, %v791, 0
        %v855 = vsel %vm382, %v792, 0
        %v858 = vsel %vm382, %v825, 0
        %v861 = vsel %vm382, %v826, 0
        %v864 = vsel %vm382, %v827, 0
        %v867 = vsel %vm382, %v828, 0
        %v870 = vsel %vm382, %v829, 0
        %v873 = vsel %vm382, %v830, 0
        %v876 = vsel %vm382, %v831, 0
        %v879 = vsel %vm382, %v832, 0
        %881 = vmatprep.subr.bf16.mxu0 0
        %882 = vmatpush1.bf16.xpose.msra.mxu0 %v858
        %883 = vmatprep.subr.bf16.mxu0 0
        %884 = vmatpush1.bf16.xpose.msra.mxu0 %v861
        %885 = vmatprep.subr.bf16.mxu0 0
        %886 = vmatpush1.bf16.xpose.msra.mxu0 %v864
        %887 = vmatprep.subr.bf16.mxu0 0
        %888 = vmatpush1.bf16.xpose.msra.mxu0 %v867
        %889 = vmatprep.subr.bf16.mxu0 0
        %890 = vmatpush1.bf16.xpose.msra.mxu0 %v870
        %891 = vmatprep.subr.bf16.mxu0 0
        %892 = vmatpush1.bf16.xpose.msra.mxu0 %v873
        %893 = vmatprep.subr.bf16.mxu0 0
        %894 = vmatpush1.bf16.xpose.msra.mxu0 %v876
        %895 = vmatprep.subr.bf16.mxu0 0
        %896 = vmatpush1.bf16.xpose.msra.mxu0 %v879
        %897 = vmatprep.subr.bf16.mxu0 0
        %898 = vmatpush1.bf16.xpose.msra.mxu0 0
        %899 = vmatprep.subr.bf16.mxu0 0
        %900 = vmatpush1.bf16.xpose.msra.mxu0 0
        %901 = vmatprep.subr.bf16.mxu0 0
        %902 = vmatpush1.bf16.xpose.msra.mxu0 0
        %903 = vmatprep.subr.bf16.mxu0 0
        %904 = vmatpush1.bf16.xpose.msra.mxu0 0
        %905 = vmatprep.subr.bf16.mxu0 0
        %906 = vmatpush1.bf16.xpose.msra.mxu0 0
        %907 = vmatprep.subr.bf16.mxu0 0
        %908 = vmatpush1.bf16.xpose.msra.mxu0 0
        %909 = vmatprep.subr.bf16.mxu0 0
        %910 = vmatpush1.bf16.xpose.msra.mxu0 0
        %911 = vmatprep.subr.bf16.mxu0 0
        %912 = vmatpush1.bf16.xpose.msra.mxu0 0
        %913 = vmatprep.mubr.bf16.mxu0 0
        %914 = vmatmul.mubr.bf16.gmra.mrb[0].mxu0 %v834
        %v915 = vpop.f32.mrb[0].mxu0
        %v916 = vadd.f32 0.0, %v915
        %v917 = vpop.f32.mrb[0].mxu0
        %v918 = vpop.f32.mrb[0].mxu0
        %v919 = vadd.f32 0.0, %v918
        %v920 = vpop.f32.mrb[0].mxu0
        %921 = vmatprep.mubr.bf16.mxu0 0
        %922 = vmatmul.mubr.bf16.gmra.mrb[0].mxu0 %v837
        %v923 = vpop.f32.mrb[0].mxu0
        %v924 = vadd.f32 0.0, %v923
        %v925 = vpop.f32.mrb[0].mxu0
        %v926 = vpop.f32.mrb[0].mxu0
        %v927 = vadd.f32 0.0, %v926
        %v928 = vpop.f32.mrb[0].mxu0
        %929 = vmatprep.mubr.bf16.mxu0 0
        %930 = vmatmul.mubr.bf16.gmra.mrb[0].mxu0 %v840
        %v931 = vpop.f32.mrb[0].mxu0
        %v932 = vadd.f32 0.0, %v931
        %v933 = vpop.f32.mrb[0].mxu0
        %v934 = vpop.f32.mrb[0].mxu0
        %v935 = vadd.f32 0.0, %v934
        %v936 = vpop.f32.mrb[0].mxu0
        %937 = vmatprep.mubr.bf16.mxu0 0
        %938 = vmatmul.mubr.bf16.gmra.mrb[0].mxu0 %v843
        %v939 = vpop.f32.mrb[0].mxu0
        %v940 = vadd.f32 0.0, %v939
        %v941 = vpop.f32.mrb[0].mxu0
        %v942 = vpop.f32.mrb[0].mxu0
        %v943 = vadd.f32 0.0, %v942
        %v944 = vpop.f32.mrb[0].mxu0
        %945 = vmatprep.mubr.bf16.mxu0 0
        %946 = vmatmul.mubr.bf16.gmra.mrb[0].mxu0 %v846
        %v947 = vpop.f32.mrb[0].mxu0
        %v948 = vadd.f32 0.0, %v947
        %v949 = vpop.f32.mrb[0].mxu0
        %v950 = vpop.f32.mrb[0].mxu0
        %v951 = vadd.f32 0.0, %v950
        %v952 = vpop.f32.mrb[0].mxu0
        %953 = vmatprep.mubr.bf16.mxu0 0
        %954 = vmatmul.mubr.bf16.gmra.mrb[0].mxu0 %v849
        %v955 = vpop.f32.mrb[0].mxu0
        %v956 = vadd.f32 0.0, %v955
        %v957 = vpop.f32.mrb[0].mxu0
        %v958 = vpop.f32.mrb[0].mxu0
        %v959 = vadd.f32 0.0, %v958
        %v960 = vpop.f32.mrb[0].mxu0
        %961 = vmatprep.mubr.bf16.mxu0 0
        %962 = vmatmul.mubr.bf16.gmra.mrb[0].mxu0 %v852
        %v963 = vpop.f32.mrb[0].mxu0
        %v964 = vadd.f32 0.0, %v963
        %v965 = vpop.f32.mrb[0].mxu0
        %v966 = vpop.f32.mrb[0].mxu0
        %v967 = vadd.f32 0.0, %v966
        %v968 = vpop.f32.mrb[0].mxu0
        %969 = vmatprep.mubr.bf16.mxu0 0
        %970 = vmatmul.mubr.bf16.gmra.mrb[0].mxu0 %v855
        %v971 = vpop.f32.mrb[0].mxu0
        %v972 = vadd.f32 0.0, %v971
        %v973 = vpop.f32.mrb[0].mxu0
        %v974 = vpop.f32.mrb[0].mxu0
        %v975 = vadd.f32 0.0, %v974
        %v976 = vpop.f32.mrb[0].mxu0
        %977 = vdwg.mxu0
        %v994 = vunpack.c.l.b16 %v222
        %v995 = vunpack.c.l.b16 %v223
        %v996 = vunpack.c.l.b16 %v224
        %v997 = vunpack.c.l.b16 %v225
        %v998 = vunpack.c.l.b16 %v226
        %v999 = vunpack.c.l.b16 %v227
        %v1000 = vunpack.c.l.b16 %v228
        %v1001 = vunpack.c.l.b16 %v229
        %v1002 = vunpack.c.l.b16 %v230
        %v1003 = vunpack.c.l.b16 %v231
        %v1004 = vunpack.c.l.b16 %v232
        %v1005 = vunpack.c.l.b16 %v233
        %v1006 = vunpack.c.l.b16 %v234
        %v1007 = vunpack.c.l.b16 %v235
        %v1008 = vunpack.c.l.b16 %v236
        %v1009 = vunpack.c.l.b16 %v237
        %v1010 = vpack.c.b16 %v995, %v994
        %v1011 = vpack.c.b16 %v997, %v996
        %v1012 = vpack.c.b16 %v999, %v998
        %v1013 = vpack.c.b16 %v1001, %v1000
        %v1014 = vpack.c.b16 %v1003, %v1002
        %v1015 = vpack.c.b16 %v1005, %v1004
        %v1016 = vpack.c.b16 %v1007, %v1006
        %v1017 = vpack.c.b16 %v1009, %v1008
        %v1034 = vunpack.c.l.b16 %v286
        %v1035 = vunpack.c.l.b16 %v287
        %v1036 = vunpack.c.l.b16 %v288
        %v1037 = vunpack.c.l.b16 %v289
        %v1038 = vunpack.c.l.b16 %v290
        %v1039 = vunpack.c.l.b16 %v291
        %v1040 = vunpack.c.l.b16 %v292
        %v1041 = vunpack.c.l.b16 %v293
        %v1042 = vunpack.c.l.b16 %v294
        %v1043 = vunpack.c.l.b16 %v295
        %v1044 = vunpack.c.l.b16 %v296
        %v1045 = vunpack.c.l.b16 %v297
        %v1046 = vunpack.c.l.b16 %v298
        %v1047 = vunpack.c.l.b16 %v299
        %v1048 = vunpack.c.l.b16 %v300
        %v1049 = vunpack.c.l.b16 %v301
        %v1050 = vpack.c.b16 %v1035, %v1034
        %v1051 = vpack.c.b16 %v1037, %v1036
        %v1052 = vpack.c.b16 %v1039, %v1038
        %v1053 = vpack.c.b16 %v1041, %v1040
        %v1054 = vpack.c.b16 %v1043, %v1042
        %v1055 = vpack.c.b16 %v1045, %v1044
        %v1056 = vpack.c.b16 %v1047, %v1046
        %v1057 = vpack.c.b16 %v1049, %v1048
        %v1059 = vsel %vm382, %v1010, 0
        %v1062 = vsel %vm382, %v1011, 0
        %v1065 = vsel %vm382, %v1012, 0
        %v1068 = vsel %vm382, %v1013, 0
        %v1071 = vsel %vm382, %v1014, 0
        %v1074 = vsel %vm382, %v1015, 0
        %v1077 = vsel %vm382, %v1016, 0
        %v1080 = vsel %vm382, %v1017, 0
        %v1083 = vsel %vm382, %v1050, 0
        %v1086 = vsel %vm382, %v1051, 0
        %v1089 = vsel %vm382, %v1052, 0
        %v1092 = vsel %vm382, %v1053, 0
        %v1095 = vsel %vm382, %v1054, 0
        %v1098 = vsel %vm382, %v1055, 0
        %v1101 = vsel %vm382, %v1056, 0
        %v1104 = vsel %vm382, %v1057, 0
        %1106 = vmatprep.subr.bf16.mxu0 0
        %1107 = vmatpush1.bf16.xpose.msra.mxu0 %v1083
        %1108 = vmatprep.subr.bf16.mxu0 0
        %1109 = vmatpush1.bf16.xpose.msra.mxu0 %v1086
        %1110 = vmatprep.subr.bf16.mxu0 0
        %1111 = vmatpush1.bf16.xpose.msra.mxu0 %v1089
        %1112 = vmatprep.subr.bf16.mxu0 0
        %1113 = vmatpush1.bf16.xpose.msra.mxu0 %v1092
        %1114 = vmatprep.subr.bf16.mxu0 0
        %1115 = vmatpush1.bf16.xpose.msra.mxu0 %v1095
        %1116 = vmatprep.subr.bf16.mxu0 0
        %1117 = vmatpush1.bf16.xpose.msra.mxu0 %v1098
        %1118 = vmatprep.subr.bf16.mxu0 0
        %1119 = vmatpush1.bf16.xpose.msra.mxu0 %v1101
        %1120 = vmatprep.subr.bf16.mxu0 0
        %1121 = vmatpush1.bf16.xpose.msra.mxu0 %v1104
        %1122 = vmatprep.subr.bf16.mxu0 0
        %1123 = vmatpush1.bf16.xpose.msra.mxu0 0
        %1124 = vmatprep.subr.bf16.mxu0 0
        %1125 = vmatpush1.bf16.xpose.msra.mxu0 0
        %1126 = vmatprep.subr.bf16.mxu0 0
        %1127 = vmatpush1.bf16.xpose.msra.mxu0 0
        %1128 = vmatprep.subr.bf16.mxu0 0
        %1129 = vmatpush1.bf16.xpose.msra.mxu0 0
        %1130 = vmatprep.subr.bf16.mxu0 0
        %1131 = vmatpush1.bf16.xpose.msra.mxu0 0
        %1132 = vmatprep.subr.bf16.mxu0 0
        %1133 = vmatpush1.bf16.xpose.msra.mxu0 0
        %1134 = vmatprep.subr.bf16.mxu0 0
        %1135 = vmatpush1.bf16.xpose.msra.mxu0 0
        %1136 = vmatprep.subr.bf16.mxu0 0
        %1137 = vmatpush1.bf16.xpose.msra.mxu0 0
        %1138 = vmatprep.mubr.bf16.mxu0 0
        %1139 = vmatmul.mubr.bf16.gmra.mrb[0].mxu0 %v1059
        %v1140 = vpop.f32.mrb[0].mxu0
        %v1141 = vadd.f32 0.0, %v1140
        %v1142 = vpop.f32.mrb[0].mxu0
        %v1143 = vpop.f32.mrb[0].mxu0
        %v1144 = vadd.f32 0.0, %v1143
        %v1145 = vpop.f32.mrb[0].mxu0
        %1146 = vmatprep.mubr.bf16.mxu0 0
        %1147 = vmatmul.mubr.bf16.gmra.mrb[0].mxu0 %v1062
        %v1148 = vpop.f32.mrb[0].mxu0
        %v1149 = vadd.f32 0.0, %v1148
        %v1150 = vpop.f32.mrb[0].mxu0
        %v1151 = vpop.f32.mrb[0].mxu0
        %v1152 = vadd.f32 0.0, %v1151
        %v1153 = vpop.f32.mrb[0].mxu0
        %1154 = vmatprep.mubr.bf16.mxu0 0
        %1155 = vmatmul.mubr.bf16.gmra.mrb[0].mxu0 %v1065
        %v1156 = vpop.f32.mrb[0].mxu0
        %v1157 = vadd.f32 0.0, %v1156
        %v1158 = vpop.f32.mrb[0].mxu0
        %v1159 = vpop.f32.mrb[0].mxu0
        %v1160 = vadd.f32 0.0, %v1159
        %v1161 = vpop.f32.mrb[0].mxu0
        %1162 = vmatprep.mubr.bf16.mxu0 0
        %1163 = vmatmul.mubr.bf16.gmra.mrb[0].mxu0 %v1068
        %v1164 = vpop.f32.mrb[0].mxu0
        %v1165 = vadd.f32 0.0, %v1164
        %v1166 = vpop.f32.mrb[0].mxu0
        %v1167 = vpop.f32.mrb[0].mxu0
        %v1168 = vadd.f32 0.0, %v1167
        %v1169 = vpop.f32.mrb[0].mxu0
        %1170 = vmatprep.mubr.bf16.mxu0 0
        %1171 = vmatmul.mubr.bf16.gmra.mrb[0].mxu0 %v1071
        %v1172 = vpop.f32.mrb[0].mxu0
        %v1173 = vadd.f32 0.0, %v1172
        %v1174 = vpop.f32.mrb[0].mxu0
        %v1175 = vpop.f32.mrb[0].mxu0
        %v1176 = vadd.f32 0.0, %v1175
        %v1177 = vpop.f32.mrb[0].mxu0
        %1178 = vmatprep.mubr.bf16.mxu0 0
        %1179 = vmatmul.mubr.bf16.gmra.mrb[0].mxu0 %v1074
        %v1180 = vpop.f32.mrb[0].mxu0
        %v1181 = vadd.f32 0.0, %v1180
        %v1182 = vpop.f32.mrb[0].mxu0
        %v1183 = vpop.f32.mrb[0].mxu0
        %v1184 = vadd.f32 0.0, %v1183
        %v1185 = vpop.f32.mrb[0].mxu0
        %1186 = vmatprep.mubr.bf16.mxu0 0
        %1187 = vmatmul.mubr.bf16.gmra.mrb[0].mxu0 %v1077
        %v1188 = vpop.f32.mrb[0].mxu0
        %v1189 = vadd.f32 0.0, %v1188
        %v1190 = vpop.f32.mrb[0].mxu0
        %v1191 = vpop.f32.mrb[0].mxu0
        %v1192 = vadd.f32 0.0, %v1191
        %v1193 = vpop.f32.mrb[0].mxu0
        %1194 = vmatprep.mubr.bf16.mxu0 0
        %1195 = vmatmul.mubr.bf16.gmra.mrb[0].mxu0 %v1080
        %v1196 = vpop.f32.mrb[0].mxu0
        %v1197 = vadd.f32 0.0, %v1196
        %v1198 = vpop.f32.mrb[0].mxu0
        %v1199 = vpop.f32.mrb[0].mxu0
        %v1200 = vadd.f32 0.0, %v1199
        %v1201 = vpop.f32.mrb[0].mxu0
        %1202 = vdwg.mxu0
        %v1203 = vmul.f32 %v466, 0.125
        %v1204 = vmul.f32 %v469, 0.125
        %v1205 = vmul.f32 %v474, 0.125
        %v1206 = vmul.f32 %v477, 0.125
        %v1207 = vmul.f32 %v482, 0.125
        %v1208 = vmul.f32 %v485, 0.125
        %v1209 = vmul.f32 %v490, 0.125
        %v1210 = vmul.f32 %v493, 0.125
        %v1211 = vmul.f32 %v498, 0.125
        %v1212 = vmul.f32 %v501, 0.125
        %v1213 = vmul.f32 %v506, 0.125
        %v1214 = vmul.f32 %v509, 0.125
        %v1215 = vmul.f32 %v514, 0.125
        %v1216 = vmul.f32 %v517, 0.125
        %v1217 = vmul.f32 %v522, 0.125
        %v1218 = vmul.f32 %v525, 0.125
        %v1219 = vmul.f32 %v691, 0.125
        %v1220 = vmul.f32 %v694, 0.125
        %v1221 = vmul.f32 %v699, 0.125
        %v1222 = vmul.f32 %v702, 0.125
        %v1223 = vmul.f32 %v707, 0.125
        %v1224 = vmul.f32 %v710, 0.125
        %v1225 = vmul.f32 %v715, 0.125
        %v1226 = vmul.f32 %v718, 0.125
        %v1227 = vmul.f32 %v723, 0.125
        %v1228 = vmul.f32 %v726, 0.125
        %v1229 = vmul.f32 %v731, 0.125
        %v1230 = vmul.f32 %v734, 0.125
        %v1231 = vmul.f32 %v739, 0.125
        %v1232 = vmul.f32 %v742, 0.125
        %v1233 = vmul.f32 %v747, 0.125
        %v1234 = vmul.f32 %v750, 0.125
        %v1235 = vmul.f32 %v916, 0.125
        %v1236 = vmul.f32 %v919, 0.125
        %v1237 = vmul.f32 %v924, 0.125
        %v1238 = vmul.f32 %v927, 0.125
        %v1239 = vmul.f32 %v932, 0.125
        %v1240 = vmul.f32 %v935, 0.125
        %v1241 = vmul.f32 %v940, 0.125
        %v1242 = vmul.f32 %v943, 0.125
        %v1243 = vmul.f32 %v948, 0.125
        %v1244 = vmul.f32 %v951, 0.125
        %v1245 = vmul.f32 %v956, 0.125
        %v1246 = vmul.f32 %v959, 0.125
        %v1247 = vmul.f32 %v964, 0.125
        %v1248 = vmul.f32 %v967, 0.125
        %v1249 = vmul.f32 %v972, 0.125
        %v1250 = vmul.f32 %v975, 0.125
        %v1251 = vmul.f32 %v1141, 0.125
        %v1252 = vmul.f32 %v1144, 0.125
        %v1253 = vmul.f32 %v1149, 0.125
        %v1254 = vmul.f32 %v1152, 0.125
        %v1255 = vmul.f32 %v1157, 0.125
        %v1256 = vmul.f32 %v1160, 0.125
        %v1257 = vmul.f32 %v1165, 0.125
        %v1258 = vmul.f32 %v1168, 0.125
        %v1259 = vmul.f32 %v1173, 0.125
        %v1260 = vmul.f32 %v1176, 0.125
        %v1261 = vmul.f32 %v1181, 0.125
        %v1262 = vmul.f32 %v1184, 0.125
        %v1263 = vmul.f32 %v1189, 0.125
        %v1264 = vmul.f32 %v1192, 0.125
        %v1265 = vmul.f32 %v1197, 0.125
        %v1266 = vmul.f32 %v1200, 0.125
        %1267 = vmax.xlane.f32.xlu0 %v1203
        %v1268 = vpop.xlane.xlu0 %1267
        %1269 = vmax.xlane.f32.xlu0 %v1204
        %v1270 = vpop.xlane.xlu0 %1269
        %1271 = vmax.xlane.f32.xlu0 %v1205
        %v1272 = vpop.xlane.xlu0 %1271
        %1273 = vmax.xlane.f32.xlu0 %v1206
        %v1274 = vpop.xlane.xlu0 %1273
        %1275 = vmax.xlane.f32.xlu0 %v1207
        %v1276 = vpop.xlane.xlu0 %1275
        %1277 = vmax.xlane.f32.xlu0 %v1208
        %v1278 = vpop.xlane.xlu0 %1277
        %1279 = vmax.xlane.f32.xlu0 %v1209
        %v1280 = vpop.xlane.xlu0 %1279
        %1281 = vmax.xlane.f32.xlu0 %v1210
        %v1282 = vpop.xlane.xlu0 %1281
        %1283 = vmax.xlane.f32.xlu0 %v1211
        %v1284 = vpop.xlane.xlu0 %1283
        %1285 = vmax.xlane.f32.xlu0 %v1212
        %v1286 = vpop.xlane.xlu0 %1285
        %1287 = vmax.xlane.f32.xlu0 %v1213
        %v1288 = vpop.xlane.xlu0 %1287
        %1289 = vmax.xlane.f32.xlu0 %v1214
        %v1290 = vpop.xlane.xlu0 %1289
        %1291 = vmax.xlane.f32.xlu0 %v1215
        %v1292 = vpop.xlane.xlu0 %1291
        %1293 = vmax.xlane.f32.xlu0 %v1216
        %v1294 = vpop.xlane.xlu0 %1293
        %1295 = vmax.xlane.f32.xlu0 %v1217
        %v1296 = vpop.xlane.xlu0 %1295
        %1297 = vmax.xlane.f32.xlu0 %v1218
        %v1298 = vpop.xlane.xlu0 %1297
        %1299 = vmax.xlane.f32.xlu0 %v1219
        %v1300 = vpop.xlane.xlu0 %1299
        %1301 = vmax.xlane.f32.xlu0 %v1220
        %v1302 = vpop.xlane.xlu0 %1301
        %1303 = vmax.xlane.f32.xlu0 %v1221
        %v1304 = vpop.xlane.xlu0 %1303
        %1305 = vmax.xlane.f32.xlu0 %v1222
        %v1306 = vpop.xlane.xlu0 %1305
        %1307 = vmax.xlane.f32.xlu0 %v1223
        %v1308 = vpop.xlane.xlu0 %1307
        %1309 = vmax.xlane.f32.xlu0 %v1224
        %v1310 = vpop.xlane.xlu0 %1309
        %1311 = vmax.xlane.f32.xlu0 %v1225
        %v1312 = vpop.xlane.xlu0 %1311
        %1313 = vmax.xlane.f32.xlu0 %v1226
        %v1314 = vpop.xlane.xlu0 %1313
        %1315 = vmax.xlane.f32.xlu0 %v1227
        %v1316 = vpop.xlane.xlu0 %1315
        %1317 = vmax.xlane.f32.xlu0 %v1228
        %v1318 = vpop.xlane.xlu0 %1317
        %1319 = vmax.xlane.f32.xlu0 %v1229
        %v1320 = vpop.xlane.xlu0 %1319
        %1321 = vmax.xlane.f32.xlu0 %v1230
        %v1322 = vpop.xlane.xlu0 %1321
        %1323 = vmax.xlane.f32.xlu0 %v1231
        %v1324 = vpop.xlane.xlu0 %1323
        %1325 = vmax.xlane.f32.xlu0 %v1232
        %v1326 = vpop.xlane.xlu0 %1325
        %1327 = vmax.xlane.f32.xlu0 %v1233
        %v1328 = vpop.xlane.xlu0 %1327
        %1329 = vmax.xlane.f32.xlu0 %v1234
        %v1330 = vpop.xlane.xlu0 %1329
        %1331 = vmax.xlane.f32.xlu0 %v1235
        %v1332 = vpop.xlane.xlu0 %1331
        %1333 = vmax.xlane.f32.xlu0 %v1236
        %v1334 = vpop.xlane.xlu0 %1333
        %1335 = vmax.xlane.f32.xlu0 %v1237
        %v1336 = vpop.xlane.xlu0 %1335
        %1337 = vmax.xlane.f32.xlu0 %v1238
        %v1338 = vpop.xlane.xlu0 %1337
        %1339 = vmax.xlane.f32.xlu0 %v1239
        %v1340 = vpop.xlane.xlu0 %1339
        %1341 = vmax.xlane.f32.xlu0 %v1240
        %v1342 = vpop.xlane.xlu0 %1341
        %1343 = vmax.xlane.f32.xlu0 %v1241
        %v1344 = vpop.xlane.xlu0 %1343
        %1345 = vmax.xlane.f32.xlu0 %v1242
        %v1346 = vpop.xlane.xlu0 %1345
        %1347 = vmax.xlane.f32.xlu0 %v1243
        %v1348 = vpop.xlane.xlu0 %1347
        %1349 = vmax.xlane.f32.xlu0 %v1244
        %v1350 = vpop.xlane.xlu0 %1349
        %1351 = vmax.xlane.f32.xlu0 %v1245
        %v1352 = vpop.xlane.xlu0 %1351
        %1353 = vmax.xlane.f32.xlu0 %v1246
        %v1354 = vpop.xlane.xlu0 %1353
        %1355 = vmax.xlane.f32.xlu0 %v1247
        %v1356 = vpop.xlane.xlu0 %1355
        %1357 = vmax.xlane.f32.xlu0 %v1248
        %v1358 = vpop.xlane.xlu0 %1357
        %1359 = vmax.xlane.f32.xlu0 %v1249
        %v1360 = vpop.xlane.xlu0 %1359
        %1361 = vmax.xlane.f32.xlu0 %v1250
        %v1362 = vpop.xlane.xlu0 %1361
        %1363 = vmax.xlane.f32.xlu0 %v1251
        %v1364 = vpop.xlane.xlu0 %1363
        %1365 = vmax.xlane.f32.xlu0 %v1252
        %v1366 = vpop.xlane.xlu0 %1365
        %1367 = vmax.xlane.f32.xlu0 %v1253
        %v1368 = vpop.xlane.xlu0 %1367
        %1369 = vmax.xlane.f32.xlu0 %v1254
        %v1370 = vpop.xlane.xlu0 %1369
        %1371 = vmax.xlane.f32.xlu0 %v1255
        %v1372 = vpop.xlane.xlu0 %1371
        %1373 = vmax.xlane.f32.xlu0 %v1256
        %v1374 = vpop.xlane.xlu0 %1373
        %1375 = vmax.xlane.f32.xlu0 %v1257
        %v1376 = vpop.xlane.xlu0 %1375
        %1377 = vmax.xlane.f32.xlu0 %v1258
        %v1378 = vpop.xlane.xlu0 %1377
        %1379 = vmax.xlane.f32.xlu0 %v1259
        %v1380 = vpop.xlane.xlu0 %1379
        %1381 = vmax.xlane.f32.xlu0 %v1260
        %v1382 = vpop.xlane.xlu0 %1381
        %1383 = vmax.xlane.f32.xlu0 %v1261
        %v1384 = vpop.xlane.xlu0 %1383
        %1385 = vmax.xlane.f32.xlu0 %v1262
        %v1386 = vpop.xlane.xlu0 %1385
        %1387 = vmax.xlane.f32.xlu0 %v1263
        %v1388 = vpop.xlane.xlu0 %1387
        %1389 = vmax.xlane.f32.xlu0 %v1264
        %v1390 = vpop.xlane.xlu0 %1389
        %1391 = vmax.xlane.f32.xlu0 %v1265
        %v1392 = vpop.xlane.xlu0 %1391
        %1393 = vmax.xlane.f32.xlu0 %v1266
        %v1394 = vpop.xlane.xlu0 %1393
        %v1395 = vsub.f32 %v1203, %v1268
        %v1396 = vsub.f32 %v1204, %v1270
        %v1397 = vsub.f32 %v1205, %v1272
        %v1398 = vsub.f32 %v1206, %v1274
        %v1399 = vsub.f32 %v1207, %v1276
        %v1400 = vsub.f32 %v1208, %v1278
        %v1401 = vsub.f32 %v1209, %v1280
        %v1402 = vsub.f32 %v1210, %v1282
        %v1403 = vsub.f32 %v1211, %v1284
        %v1404 = vsub.f32 %v1212, %v1286
        %v1405 = vsub.f32 %v1213, %v1288
        %v1406 = vsub.f32 %v1214, %v1290
        %v1407 = vsub.f32 %v1215, %v1292
        %v1408 = vsub.f32 %v1216, %v1294
        %v1409 = vsub.f32 %v1217, %v1296
        %v1410 = vsub.f32 %v1218, %v1298
        %v1411 = vsub.f32 %v1219, %v1300
        %v1412 = vsub.f32 %v1220, %v1302
        %v1413 = vsub.f32 %v1221, %v1304
        %v1414 = vsub.f32 %v1222, %v1306
        %v1415 = vsub.f32 %v1223, %v1308
        %v1416 = vsub.f32 %v1224, %v1310
        %v1417 = vsub.f32 %v1225, %v1312
        %v1418 = vsub.f32 %v1226, %v1314
        %v1419 = vsub.f32 %v1227, %v1316
        %v1420 = vsub.f32 %v1228, %v1318
        %v1421 = vsub.f32 %v1229, %v1320
        %v1422 = vsub.f32 %v1230, %v1322
        %v1423 = vsub.f32 %v1231, %v1324
        %v1424 = vsub.f32 %v1232, %v1326
        %v1425 = vsub.f32 %v1233, %v1328
        %v1426 = vsub.f32 %v1234, %v1330
        %v1427 = vsub.f32 %v1235, %v1332
        %v1428 = vsub.f32 %v1236, %v1334
        %v1429 = vsub.f32 %v1237, %v1336
        %v1430 = vsub.f32 %v1238, %v1338
        %v1431 = vsub.f32 %v1239, %v1340
        %v1432 = vsub.f32 %v1240, %v1342
        %v1433 = vsub.f32 %v1241, %v1344
        %v1434 = vsub.f32 %v1242, %v1346
        %v1435 = vsub.f32 %v1243, %v1348
        %v1436 = vsub.f32 %v1244, %v1350
        %v1437 = vsub.f32 %v1245, %v1352
        %v1438 = vsub.f32 %v1246, %v1354
        %v1439 = vsub.f32 %v1247, %v1356
        %v1440 = vsub.f32 %v1248, %v1358
        %v1441 = vsub.f32 %v1249, %v1360
        %v1442 = vsub.f32 %v1250, %v1362
        %v1443 = vsub.f32 %v1251, %v1364
        %v1444 = vsub.f32 %v1252, %v1366
        %v1445 = vsub.f32 %v1253, %v1368
        %v1446 = vsub.f32 %v1254, %v1370
        %v1447 = vsub.f32 %v1255, %v1372
        %v1448 = vsub.f32 %v1256, %v1374
        %v1449 = vsub.f32 %v1257, %v1376
        %v1450 = vsub.f32 %v1258, %v1378
        %v1451 = vsub.f32 %v1259, %v1380
        %v1452 = vsub.f32 %v1260, %v1382
        %v1453 = vsub.f32 %v1261, %v1384
        %v1454 = vsub.f32 %v1262, %v1386
        %v1455 = vsub.f32 %v1263, %v1388
        %v1456 = vsub.f32 %v1264, %v1390
        %v1457 = vsub.f32 %v1265, %v1392
        %v1458 = vsub.f32 %v1266, %v1394
        %v1459 = vmul.f32 %v1395, 1.442695
        %v1460 = vpow.pop %v1459
        %v1461 = vmul.f32 %v1396, 1.442695
        %v1462 = vpow.pop %v1461
        %v1463 = vmul.f32 %v1397, 1.442695
        %v1464 = vpow.pop %v1463
        %v1465 = vmul.f32 %v1398, 1.442695
        %v1466 = vpow.pop %v1465
        %v1467 = vmul.f32 %v1399, 1.442695
        %v1468 = vpow.pop %v1467
        %v1469 = vmul.f32 %v1400, 1.442695
        %v1470 = vpow.pop %v1469
        %v1471 = vmul.f32 %v1401, 1.442695
        %v1472 = vpow.pop %v1471
        %v1473 = vmul.f32 %v1402, 1.442695
        %v1474 = vpow.pop %v1473
        %v1475 = vmul.f32 %v1403, 1.442695
        %v1476 = vpow.pop %v1475
        %v1477 = vmul.f32 %v1404, 1.442695
        %v1478 = vpow.pop %v1477
        %v1479 = vmul.f32 %v1405, 1.442695
        %v1480 = vpow.pop %v1479
        %v1481 = vmul.f32 %v1406, 1.442695
        %v1482 = vpow.pop %v1481
        %v1483 = vmul.f32 %v1407, 1.442695
        %v1484 = vpow.pop %v1483
        %v1485 = vmul.f32 %v1408, 1.442695
        %v1486 = vpow.pop %v1485
        %v1487 = vmul.f32 %v1409, 1.442695
        %v1488 = vpow.pop %v1487
        %v1489 = vmul.f32 %v1410, 1.442695
        %v1490 = vpow.pop %v1489
        %v1491 = vmul.f32 %v1411, 1.442695
        %v1492 = vpow.pop %v1491
        %v1493 = vmul.f32 %v1412, 1.442695
        %v1494 = vpow.pop %v1493
        %v1495 = vmul.f32 %v1413, 1.442695
        %v1496 = vpow.pop %v1495
        %v1497 = vmul.f32 %v1414, 1.442695
        %v1498 = vpow.pop %v1497
        %v1499 = vmul.f32 %v1415, 1.442695
        %v1500 = vpow.pop %v1499
        %v1501 = vmul.f32 %v1416, 1.442695
        %v1502 = vpow.pop %v1501
        %v1503 = vmul.f32 %v1417, 1.442695
        %v1504 = vpow.pop %v1503
        %v1505 = vmul.f32 %v1418, 1.442695
        %v1506 = vpow.pop %v1505
        %v1507 = vmul.f32 %v1419, 1.442695
        %v1508 = vpow.pop %v1507
        %v1509 = vmul.f32 %v1420, 1.442695
        %v1510 = vpow.pop %v1509
        %v1511 = vmul.f32 %v1421, 1.442695
        %v1512 = vpow.pop %v1511
        %v1513 = vmul.f32 %v1422, 1.442695
        %v1514 = vpow.pop %v1513
        %v1515 = vmul.f32 %v1423, 1.442695
        %v1516 = vpow.pop %v1515
        %v1517 = vmul.f32 %v1424, 1.442695
        %v1518 = vpow.pop %v1517
        %v1519 = vmul.f32 %v1425, 1.442695
        %v1520 = vpow.pop %v1519
        %v1521 = vmul.f32 %v1426, 1.442695
        %v1522 = vpow.pop %v1521
        %v1523 = vmul.f32 %v1427, 1.442695
        %v1524 = vpow.pop %v1523
        %v1525 = vmul.f32 %v1428, 1.442695
        %v1526 = vpow.pop %v1525
        %v1527 = vmul.f32 %v1429, 1.442695
        %v1528 = vpow.pop %v1527
        %v1529 = vmul.f32 %v1430, 1.442695
        %v1530 = vpow.pop %v1529
        %v1531 = vmul.f32 %v1431, 1.442695
        %v1532 = vpow.pop %v1531
        %v1533 = vmul.f32 %v1432, 1.442695
        %v1534 = vpow.pop %v1533
        %v1535 = vmul.f32 %v1433, 1.442695
        %v1536 = vpow.pop %v1535
        %v1537 = vmul.f32 %v1434, 1.442695
        %v1538 = vpow.pop %v1537
        %v1539 = vmul.f32 %v1435, 1.442695
        %v1540 = vpow.pop %v1539
        %v1541 = vmul.f32 %v1436, 1.442695
        %v1542 = vpow.pop %v1541
        %v1543 = vmul.f32 %v1437, 1.442695
        %v1544 = vpow.pop %v1543
        %v1545 = vmul.f32 %v1438, 1.442695
        %v1546 = vpow.pop %v1545
        %v1547 = vmul.f32 %v1439, 1.442695
        %v1548 = vpow.pop %v1547
        %v1549 = vmul.f32 %v1440, 1.442695
        %v1550 = vpow.pop %v1549
        %v1551 = vmul.f32 %v1441, 1.442695
        %v1552 = vpow.pop %v1551
        %v1553 = vmul.f32 %v1442, 1.442695
        %v1554 = vpow.pop %v1553
        %v1555 = vmul.f32 %v1443, 1.442695
        %v1556 = vpow.pop %v1555
        %v1557 = vmul.f32 %v1444, 1.442695
        %v1558 = vpow.pop %v1557
        %v1559 = vmul.f32 %v1445, 1.442695
        %v1560 = vpow.pop %v1559
        %v1561 = vmul.f32 %v1446, 1.442695
        %v1562 = vpow.pop %v1561
        %v1563 = vmul.f32 %v1447, 1.442695
        %v1564 = vpow.pop %v1563
        %v1565 = vmul.f32 %v1448, 1.442695
        %v1566 = vpow.pop %v1565
        %v1567 = vmul.f32 %v1449, 1.442695
        %v1568 = vpow.pop %v1567
        %v1569 = vmul.f32 %v1450, 1.442695
        %v1570 = vpow.pop %v1569
        %v1571 = vmul.f32 %v1451, 1.442695
        %v1572 = vpow.pop %v1571
        %v1573 = vmul.f32 %v1452, 1.442695
        %v1574 = vpow.pop %v1573
        %v1575 = vmul.f32 %v1453, 1.442695
        %v1576 = vpow.pop %v1575
        %v1577 = vmul.f32 %v1454, 1.442695
        %v1578 = vpow.pop %v1577
        %v1579 = vmul.f32 %v1455, 1.442695
        %v1580 = vpow.pop %v1579
        %v1581 = vmul.f32 %v1456, 1.442695
        %v1582 = vpow.pop %v1581
        %v1583 = vmul.f32 %v1457, 1.442695
        %v1584 = vpow.pop %v1583
        %v1585 = vmul.f32 %v1458, 1.442695
        %v1586 = vpow.pop %v1585
        %1587 = vadd.xlane.f32.xlu0 %v1460
        %v1588 = vpop.xlane.xlu0 %1587
        %1589 = vadd.xlane.f32.xlu0 %v1462
        %v1590 = vpop.xlane.xlu0 %1589
        %1591 = vadd.xlane.f32.xlu0 %v1464
        %v1592 = vpop.xlane.xlu0 %1591
        %1593 = vadd.xlane.f32.xlu0 %v1466
        %v1594 = vpop.xlane.xlu0 %1593
        %1595 = vadd.xlane.f32.xlu0 %v1468
        %v1596 = vpop.xlane.xlu0 %1595
        %1597 = vadd.xlane.f32.xlu0 %v1470
        %v1598 = vpop.xlane.xlu0 %1597
        %1599 = vadd.xlane.f32.xlu0 %v1472
        %v1600 = vpop.xlane.xlu0 %1599
        %1601 = vadd.xlane.f32.xlu0 %v1474
        %v1602 = vpop.xlane.xlu0 %1601
        %1603 = vadd.xlane.f32.xlu0 %v1476
        %v1604 = vpop.xlane.xlu0 %1603
        %1605 = vadd.xlane.f32.xlu0 %v1478
        %v1606 = vpop.xlane.xlu0 %1605
        %1607 = vadd.xlane.f32.xlu0 %v1480
        %v1608 = vpop.xlane.xlu0 %1607
        %1609 = vadd.xlane.f32.xlu0 %v1482
        %v1610 = vpop.xlane.xlu0 %1609
        %1611 = vadd.xlane.f32.xlu0 %v1484
        %v1612 = vpop.xlane.xlu0 %1611
        %1613 = vadd.xlane.f32.xlu0 %v1486
        %v1614 = vpop.xlane.xlu0 %1613
        %1615 = vadd.xlane.f32.xlu0 %v1488
        %v1616 = vpop.xlane.xlu0 %1615
        %1617 = vadd.xlane.f32.xlu0 %v1490
        %v1618 = vpop.xlane.xlu0 %1617
        %1619 = vadd.xlane.f32.xlu0 %v1492
        %v1620 = vpop.xlane.xlu0 %1619
        %1621 = vadd.xlane.f32.xlu0 %v1494
        %v1622 = vpop.xlane.xlu0 %1621
        %1623 = vadd.xlane.f32.xlu0 %v1496
        %v1624 = vpop.xlane.xlu0 %1623
        %1625 = vadd.xlane.f32.xlu0 %v1498
        %v1626 = vpop.xlane.xlu0 %1625
        %1627 = vadd.xlane.f32.xlu0 %v1500
        %v1628 = vpop.xlane.xlu0 %1627
        %1629 = vadd.xlane.f32.xlu0 %v1502
        %v1630 = vpop.xlane.xlu0 %1629
        %1631 = vadd.xlane.f32.xlu0 %v1504
        %v1632 = vpop.xlane.xlu0 %1631
        %1633 = vadd.xlane.f32.xlu0 %v1506
        %v1634 = vpop.xlane.xlu0 %1633
        %1635 = vadd.xlane.f32.xlu0 %v1508
        %v1636 = vpop.xlane.xlu0 %1635
        %1637 = vadd.xlane.f32.xlu0 %v1510
        %v1638 = vpop.xlane.xlu0 %1637
        %1639 = vadd.xlane.f32.xlu0 %v1512
        %v1640 = vpop.xlane.xlu0 %1639
        %1641 = vadd.xlane.f32.xlu0 %v1514
        %v1642 = vpop.xlane.xlu0 %1641
        %1643 = vadd.xlane.f32.xlu0 %v1516
        %v1644 = vpop.xlane.xlu0 %1643
        %1645 = vadd.xlane.f32.xlu0 %v1518
        %v1646 = vpop.xlane.xlu0 %1645
        %1647 = vadd.xlane.f32.xlu0 %v1520
        %v1648 = vpop.xlane.xlu0 %1647
        %1649 = vadd.xlane.f32.xlu0 %v1522
        %v1650 = vpop.xlane.xlu0 %1649
        %1651 = vadd.xlane.f32.xlu0 %v1524
        %v1652 = vpop.xlane.xlu0 %1651
        %1653 = vadd.xlane.f32.xlu0 %v1526
        %v1654 = vpop.xlane.xlu0 %1653
        %1655 = vadd.xlane.f32.xlu0 %v1528
        %v1656 = vpop.xlane.xlu0 %1655
        %1657 = vadd.xlane.f32.xlu0 %v1530
        %v1658 = vpop.xlane.xlu0 %1657
        %1659 = vadd.xlane.f32.xlu0 %v1532
        %v1660 = vpop.xlane.xlu0 %1659
        %1661 = vadd.xlane.f32.xlu0 %v1534
        %v1662 = vpop.xlane.xlu0 %1661
        %1663 = vadd.xlane.f32.xlu0 %v1536
        %v1664 = vpop.xlane.xlu0 %1663
        %1665 = vadd.xlane.f32.xlu0 %v1538
        %v1666 = vpop.xlane.xlu0 %1665
        %1667 = vadd.xlane.f32.xlu0 %v1540
        %v1668 = vpop.xlane.xlu0 %1667
        %1669 = vadd.xlane.f32.xlu0 %v1542
        %v1670 = vpop.xlane.xlu0 %1669
        %1671 = vadd.xlane.f32.xlu0 %v1544
        %v1672 = vpop.xlane.xlu0 %1671
        %1673 = vadd.xlane.f32.xlu0 %v1546
        %v1674 = vpop.xlane.xlu0 %1673
        %1675 = vadd.xlane.f32.xlu0 %v1548
        %v1676 = vpop.xlane.xlu0 %1675
        %1677 = vadd.xlane.f32.xlu0 %v1550
        %v1678 = vpop.xlane.xlu0 %1677
        %1679 = vadd.xlane.f32.xlu0 %v1552
        %v1680 = vpop.xlane.xlu0 %1679
        %1681 = vadd.xlane.f32.xlu0 %v1554
        %v1682 = vpop.xlane.xlu0 %1681
        %1683 = vadd.xlane.f32.xlu0 %v1556
        %v1684 = vpop.xlane.xlu0 %1683
        %1685 = vadd.xlane.f32.xlu0 %v1558
        %v1686 = vpop.xlane.xlu0 %1685
        %1687 = vadd.xlane.f32.xlu0 %v1560
        %v1688 = vpop.xlane.xlu0 %1687
        %1689 = vadd.xlane.f32.xlu0 %v1562
        %v1690 = vpop.xlane.xlu0 %1689
        %1691 = vadd.xlane.f32.xlu0 %v1564
        %v1692 = vpop.xlane.xlu0 %1691
        %1693 = vadd.xlane.f32.xlu0 %v1566
        %v1694 = vpop.xlane.xlu0 %1693
        %1695 = vadd.xlane.f32.xlu0 %v1568
        %v1696 = vpop.xlane.xlu0 %1695
        %1697 = vadd.xlane.f32.xlu0 %v1570
        %v1698 = vpop.xlane.xlu0 %1697
        %1699 = vadd.xlane.f32.xlu0 %v1572
        %v1700 = vpop.xlane.xlu0 %1699
        %1701 = vadd.xlane.f32.xlu0 %v1574
        %v1702 = vpop.xlane.xlu0 %1701
        %1703 = vadd.xlane.f32.xlu0 %v1576
        %v1704 = vpop.xlane.xlu0 %1703
        %1705 = vadd.xlane.f32.xlu0 %v1578
        %v1706 = vpop.xlane.xlu0 %1705
        %1707 = vadd.xlane.f32.xlu0 %v1580
        %v1708 = vpop.xlane.xlu0 %1707
        %1709 = vadd.xlane.f32.xlu0 %v1582
        %v1710 = vpop.xlane.xlu0 %1709
        %1711 = vadd.xlane.f32.xlu0 %v1584
        %v1712 = vpop.xlane.xlu0 %1711
        %1713 = vadd.xlane.f32.xlu0 %v1586
        %v1714 = vpop.xlane.xlu0 %1713
        %v1715 = vrcp.pop %v1588
        %v1716 = vrcp.pop %v1590
        %v1717 = vrcp.pop %v1592
        %v1718 = vrcp.pop %v1594
        %v1719 = vrcp.pop %v1596
        %v1720 = vrcp.pop %v1598
        %v1721 = vrcp.pop %v1600
        %v1722 = vrcp.pop %v1602
        %v1723 = vrcp.pop %v1604
        %v1724 = vrcp.pop %v1606
        %v1725 = vrcp.pop %v1608
        %v1726 = vrcp.pop %v1610
        %v1727 = vrcp.pop %v1612
        %v1728 = vrcp.pop %v1614
        %v1729 = vrcp.pop %v1616
        %v1730 = vrcp.pop %v1618
        %v1731 = vrcp.pop %v1620
        %v1732 = vrcp.pop %v1622
        %v1733 = vrcp.pop %v1624
        %v1734 = vrcp.pop %v1626
        %v1735 = vrcp.pop %v1628
        %v1736 = vrcp.pop %v1630
        %v1737 = vrcp.pop %v1632
        %v1738 = vrcp.pop %v1634
        %v1739 = vrcp.pop %v1636
        %v1740 = vrcp.pop %v1638
        %v1741 = vrcp.pop %v1640
        %v1742 = vrcp.pop %v1642
        %v1743 = vrcp.pop %v1644
        %v1744 = vrcp.pop %v1646
        %v1745 = vrcp.pop %v1648
        %v1746 = vrcp.pop %v1650
        %v1747 = vrcp.pop %v1652
        %v1748 = vrcp.pop %v1654
        %v1749 = vrcp.pop %v1656
        %v1750 = vrcp.pop %v1658
        %v1751 = vrcp.pop %v1660
        %v1752 = vrcp.pop %v1662
        %v1753 = vrcp.pop %v1664
        %v1754 = vrcp.pop %v1666
        %v1755 = vrcp.pop %v1668
        %v1756 = vrcp.pop %v1670
        %v1757 = vrcp.pop %v1672
        %v1758 = vrcp.pop %v1674
        %v1759 = vrcp.pop %v1676
        %v1760 = vrcp.pop %v1678
        %v1761 = vrcp.pop %v1680
        %v1762 = vrcp.pop %v1682
        %v1763 = vrcp.pop %v1684
        %v1764 = vrcp.pop %v1686
        %v1765 = vrcp.pop %v1688
        %v1766 = vrcp.pop %v1690
        %v1767 = vrcp.pop %v1692
        %v1768 = vrcp.pop %v1694
        %v1769 = vrcp.pop %v1696
        %v1770 = vrcp.pop %v1698
        %v1771 = vrcp.pop %v1700
        %v1772 = vrcp.pop %v1702
        %v1773 = vrcp.pop %v1704
        %v1774 = vrcp.pop %v1706
        %v1775 = vrcp.pop %v1708
        %v1776 = vrcp.pop %v1710
        %v1777 = vrcp.pop %v1712
        %v1778 = vrcp.pop %v1714
        %v1779 = vmul.f32 %v1460, %v1715
        %v1780 = vmul.f32 %v1462, %v1716
        %v1781 = vmul.f32 %v1464, %v1717
        %v1782 = vmul.f32 %v1466, %v1718
        %v1783 = vmul.f32 %v1468, %v1719
        %v1784 = vmul.f32 %v1470, %v1720
        %v1785 = vmul.f32 %v1472, %v1721
        %v1786 = vmul.f32 %v1474, %v1722
        %v1787 = vmul.f32 %v1476, %v1723
        %v1788 = vmul.f32 %v1478, %v1724
        %v1789 = vmul.f32 %v1480, %v1725
        %v1790 = vmul.f32 %v1482, %v1726
        %v1791 = vmul.f32 %v1484, %v1727
        %v1792 = vmul.f32 %v1486, %v1728
        %v1793 = vmul.f32 %v1488, %v1729
        %v1794 = vmul.f32 %v1490, %v1730
        %v1795 = vmul.f32 %v1492, %v1731
        %v1796 = vmul.f32 %v1494, %v1732
        %v1797 = vmul.f32 %v1496, %v1733
        %v1798 = vmul.f32 %v1498, %v1734
        %v1799 = vmul.f32 %v1500, %v1735
        %v1800 = vmul.f32 %v1502, %v1736
        %v1801 = vmul.f32 %v1504, %v1737
        %v1802 = vmul.f32 %v1506, %v1738
        %v1803 = vmul.f32 %v1508, %v1739
        %v1804 = vmul.f32 %v1510, %v1740
        %v1805 = vmul.f32 %v1512, %v1741
        %v1806 = vmul.f32 %v1514, %v1742
        %v1807 = vmul.f32 %v1516, %v1743
        %v1808 = vmul.f32 %v1518, %v1744
        %v1809 = vmul.f32 %v1520, %v1745
        %v1810 = vmul.f32 %v1522, %v1746
        %v1811 = vmul.f32 %v1524, %v1747
        %v1812 = vmul.f32 %v1526, %v1748
        %v1813 = vmul.f32 %v1528, %v1749
        %v1814 = vmul.f32 %v1530, %v1750
        %v1815 = vmul.f32 %v1532, %v1751
        %v1816 = vmul.f32 %v1534, %v1752
        %v1817 = vmul.f32 %v1536, %v1753
        %v1818 = vmul.f32 %v1538, %v1754
        %v1819 = vmul.f32 %v1540, %v1755
        %v1820 = vmul.f32 %v1542, %v1756
        %v1821 = vmul.f32 %v1544, %v1757
        %v1822 = vmul.f32 %v1546, %v1758
        %v1823 = vmul.f32 %v1548, %v1759
        %v1824 = vmul.f32 %v1550, %v1760
        %v1825 = vmul.f32 %v1552, %v1761
        %v1826 = vmul.f32 %v1554, %v1762
        %v1827 = vmul.f32 %v1556, %v1763
        %v1828 = vmul.f32 %v1558, %v1764
        %v1829 = vmul.f32 %v1560, %v1765
        %v1830 = vmul.f32 %v1562, %v1766
        %v1831 = vmul.f32 %v1564, %v1767
        %v1832 = vmul.f32 %v1566, %v1768
        %v1833 = vmul.f32 %v1568, %v1769
        %v1834 = vmul.f32 %v1570, %v1770
        %v1835 = vmul.f32 %v1572, %v1771
        %v1836 = vmul.f32 %v1574, %v1772
        %v1837 = vmul.f32 %v1576, %v1773
        %v1838 = vmul.f32 %v1578, %v1774
        %v1839 = vmul.f32 %v1580, %v1775
        %v1840 = vmul.f32 %v1582, %v1776
        %v1841 = vmul.f32 %v1584, %v1777
        %v1842 = vmul.f32 %v1586, %v1778
        %1843 = vst [vmem:[%s157] sm:$0xff] %v1779
        %1844 = vst [vmem:[%s157 + $0x8] sm:$0xff] %v1780
        %1845 = vst [vmem:[%s157 + $0x10] sm:$0xff] %v1781
        %1846 = vst [vmem:[%s157 + $0x18] sm:$0xff] %v1782
        %1847 = vst [vmem:[%s157 + $0x20] sm:$0xff] %v1783
        %1848 = vst [vmem:[%s157 + $0x28] sm:$0xff] %v1784
        %1849 = vst [vmem:[%s157 + $0x30] sm:$0xff] %v1785
        %1850 = vst [vmem:[%s157 + $0x38] sm:$0xff] %v1786
        %1851 = vst [vmem:[%s157 + $0x40] sm:$0xff] %v1787
        %1852 = vst [vmem:[%s157 + $0x48] sm:$0xff] %v1788
        %1853 = vst [vmem:[%s157 + $0x50] sm:$0xff] %v1789
        %1854 = vst [vmem:[%s157 + $0x58] sm:$0xff] %v1790
        %1855 = vst [vmem:[%s157 + $0x60] sm:$0xff] %v1791
        %1856 = vst [vmem:[%s157 + $0x68] sm:$0xff] %v1792
        %1857 = vst [vmem:[%s157 + $0x70] sm:$0xff] %v1793
        %1858 = vst [vmem:[%s157 + $0x78] sm:$0xff] %v1794
        %1859 = vst [vmem:[%s157 + $0x80] sm:$0xff] %v1795
        %1860 = vst [vmem:[%s157 + $0x88] sm:$0xff] %v1796
        %1861 = vst [vmem:[%s157 + $0x90] sm:$0xff] %v1797
        %1862 = vst [vmem:[%s157 + $0x98] sm:$0xff] %v1798
        %1863 = vst [vmem:[%s157 + $0xa0] sm:$0xff] %v1799
        %1864 = vst [vmem:[%s157 + $0xa8] sm:$0xff] %v1800
        %1865 = vst [vmem:[%s157 + $0xb0] sm:$0xff] %v1801
        %1866 = vst [vmem:[%s157 + $0xb8] sm:$0xff] %v1802
        %1867 = vst [vmem:[%s157 + $0xc0] sm:$0xff] %v1803
        %1868 = vst [vmem:[%s157 + $0xc8] sm:$0xff] %v1804
        %1869 = vst [vmem:[%s157 + $0xd0] sm:$0xff] %v1805
        %1870 = vst [vmem:[%s157 + $0xd8] sm:$0xff] %v1806
        %1871 = vst [vmem:[%s157 + $0xe0] sm:$0xff] %v1807
        %1872 = vst [vmem:[%s157 + $0xe8] sm:$0xff] %v1808
        %1873 = vst [vmem:[%s157 + $0xf0] sm:$0xff] %v1809
        %1874 = vst [vmem:[%s157 + $0xf8] sm:$0xff] %v1810
        %1875 = vst [vmem:[%s157 + $0x100] sm:$0xff] %v1811
        %1876 = vst [vmem:[%s157 + $0x108] sm:$0xff] %v1812
        %1877 = vst [vmem:[%s157 + $0x110] sm:$0xff] %v1813
        %1878 = vst [vmem:[%s157 + $0x118] sm:$0xff] %v1814
        %1879 = vst [vmem:[%s157 + $0x120] sm:$0xff] %v1815
        %1880 = vst [vmem:[%s157 + $0x128] sm:$0xff] %v1816
        %1881 = vst [vmem:[%s157 + $0x130] sm:$0xff] %v1817
        %1882 = vst [vmem:[%s157 + $0x138] sm:$0xff] %v1818
        %1883 = vst [vmem:[%s157 + $0x140] sm:$0xff] %v1819
        %1884 = vst [vmem:[%s157 + $0x148] sm:$0xff] %v1820
        %1885 = vst [vmem:[%s157 + $0x150] sm:$0xff] %v1821
        %1886 = vst [vmem:[%s157 + $0x158] sm:$0xff] %v1822
        %1887 = vst [vmem:[%s157 + $0x160] sm:$0xff] %v1823
        %1888 = vst [vmem:[%s157 + $0x168] sm:$0xff] %v1824
        %1889 = vst [vmem:[%s157 + $0x170] sm:$0xff] %v1825
        %1890 = vst [vmem:[%s157 + $0x178] sm:$0xff] %v1826
        %1891 = vst [vmem:[%s157 + $0x180] sm:$0xff] %v1827
        %1892 = vst [vmem:[%s157 + $0x188] sm:$0xff] %v1828
        %1893 = vst [vmem:[%s157 + $0x190] sm:$0xff] %v1829
        %1894 = vst [vmem:[%s157 + $0x198] sm:$0xff] %v1830
        %1895 = vst [vmem:[%s157 + $0x1a0] sm:$0xff] %v1831
        %1896 = vst [vmem:[%s157 + $0x1a8] sm:$0xff] %v1832
        %1897 = vst [vmem:[%s157 + $0x1b0] sm:$0xff] %v1833
        %1898 = vst [vmem:[%s157 + $0x1b8] sm:$0xff] %v1834
        %1899 = vst [vmem:[%s157 + $0x1c0] sm:$0xff] %v1835
        %1900 = vst [vmem:[%s157 + $0x1c8] sm:$0xff] %v1836
        %1901 = vst [vmem:[%s157 + $0x1d0] sm:$0xff] %v1837
        %1902 = vst [vmem:[%s157 + $0x1d8] sm:$0xff] %v1838
        %1903 = vst [vmem:[%s157 + $0x1e0] sm:$0xff] %v1839
        %1904 = vst [vmem:[%s157 + $0x1e8] sm:$0xff] %v1840
        %1905 = vst [vmem:[%s157 + $0x1f0] sm:$0xff] %v1841
        %1906 = vst [vmem:[%s157 + $0x1f8] sm:$0xff] %v1842
        %s1907 = sand.u32 %s76, 1
        %s1908 = scalar_lea.sflag [#allocation3], %s1907
        %s1909 = sand.u32 %s76, 1
        %s1910 = smul.addr %s1909, 512
        %s1911 = scalar_lea.vmem [#allocation2], %s1910
        // Predicated region
        $region29: #{tpu_custom_call.1} parent=27 // pred_check
          %p1912 = pneg %p86
        $region30: #{tpu_custom_call.1} parent=27 // pred_check_branch
          %1914 = sbr.rel (%p1912) target = $region32
        $region31: #{tpu_custom_call.1} parent=27 // pred_region
          %s1915 = smul.u32 4, %s16
          %s1917 = ssub.s32 8192, 8192
          %1918 = vsyncadd %s1908, %s1917
          %s1919 = smul.addr %s1915, 16
          %s1920 = smul.addr %s1919, 128
          %s1921 = scalar_lea.hbm %s2, %s1920
          %s1922 = sshll.u32 %s1911, 4
          %s1923 = int_to_ptr.vmem [resolvable:$true] %s1922
          %1928 = dma.vmem_to_hbm [thread:$0]  %s1923, 8192, %s1921, %s1908, 128, 128, 8
        $region32: #{tpu_custom_call.1} parent=27 // pred_fallthru
          _
      $region28: #{tpu_custom_call.1} parent=5 // pred_fallthru
        _
      %p1929 = scmp.le.s32.totalorder 2, %s11
      // Predicated region
      $region33: #{tpu_custom_call.1} parent=5 // pred_check
        %p1930 = pneg %p1929
      $region34: #{tpu_custom_call.1} parent=5 // pred_check_branch
        %1932 = sbr.rel (%p1930) target = $region36
      $region35: #{tpu_custom_call.1} parent=5 // pred_region
        %s1933 = ssub.s32 %s11, 2
        // Predicated region
        $region37: #{tpu_custom_call.1} parent=35 // pred_check
          %p1934 = pneg %p92
        $region38: #{tpu_custom_call.1} parent=35 // pred_check_branch
          %1936 = sbr.rel (%p1934) target = $region40
        $region39: #{tpu_custom_call.1} parent=35 // pred_region
          %s1937 = sand.u32 %s77, 1
          %s1938 = scalar_lea.sflag [#allocation3], %s1937
          %s1939 = sand.u32 %s77, 1
          %s1940 = smul.addr %s1939, 512
          %s1941 = scalar_lea.vmem [#allocation2], %s1940
          %1942 = dma.done %s1938, 8192
        $region40: #{tpu_custom_call.1} parent=35 // pred_fallthru
          _
      $region36: #{tpu_custom_call.1} parent=5 // pred_fallthru
        _
    $region6: #{tpu_custom_call.1} parent=1 // loop_footer
      %s15 = sadd.s32 1, %s11
    $region7: #{tpu_custom_call.1} parent=1 // loop_footer_branch
      %10 = sbr.rel target = $region3
    $region8: #{tpu_custom_call.1} parent=1 // loop_exit
      _
    %1943 = vsyncpa [#allocation3], 1
    %s1944 = scalar_lea.sflag [#allocation3], 1
    %1945 = vsyncpa %s1944, 1

</llo_original>
